<compile_context>
chip_gen: v7x
topology: tpu7x:2x2x1
jax: 0.10.0
libtpu: 0.0.40
codegen_flags: <defaults>
</compile_context>

<pallas_src>
import jax
import jax.numpy as jnp
from jax.experimental import pallas as pl
from jax.experimental.pallas import tpu as pltpu

_HIGHEST = jax.lax.Precision.HIGHEST


def critic_kernel(x_ref, w1_ref, b1_ref, w2_ref, b2_ref, w3_ref, b3_ref, o_ref):
    x = x_ref[...]                                                       # (TB, S)
    h1 = jnp.dot(x, w1_ref[...], preferred_element_type=jnp.float32,
                 precision=_HIGHEST) + b1_ref[...]
    h1 = jnp.maximum(h1, 0.0)                                            # (TB, 64)
    h2 = jnp.dot(h1, w2_ref[...], preferred_element_type=jnp.float32,
                 precision=_HIGHEST) + b2_ref[...]
    h2 = jnp.maximum(h2, 0.0)                                            # (TB, 32)
    # Layer 3 (32 -> 1) as w3 (1,32) contracted with h2 (TB,32) on their last dims:
    # a q@k^T-style MXU matmul whose (1, TB) result is already lane-dense, so no
    # in-kernel relayout/reshape is needed and the output store is dense.
    v = jax.lax.dot_general(
        w3_ref[...], h2,
        dimension_numbers=(((1,), (1,)), ((), ())),
        preferred_element_type=jnp.float32,
        precision=_HIGHEST)                                              # (1, TB)
    o_ref[...] = v + b3_ref[0, 0]                                        # b3 scalar (SMEM)


def _round_up(x, m):
    return ((x + m - 1) // m) * m


def critic_forward(state, params, *, block_rows=8192):
    """state: (B, state_dim) f32.  params: w1 (S,64), b1 (1,64), w2 (64,32),
    b2 (1,32), w3 (1,32) [PyTorch row layout], b3 (1,1).  Returns (B, 1) f32."""
    B, S = state.shape
    w1, b1 = params["w1"], params["b1"]
    w2, b2 = params["w2"], params["b2"]
    w3, b3 = params["w3"], params["b3"]

    if B <= 1024:
        # Tiny batch: one full-array block.  Block dims equal the array dims, which
        # always satisfies the (8,128) rule, and a single grid step is cheapest here.
        TB = B
    else:
        # Batch tile: multiple of 128 (lane constraint of the (1, TB) out block, and
        # automatically a multiple of 8 for the (TB, S) in block), capped at
        # block_rows, and sized to give >= ~8 tiles so the "parallel" grid axis can
        # feed both v7x TensorCores and keep the DMA pipeline busy.
        TB = min(block_rows, _round_up(pl.cdiv(B, 8), 128))
    grid = pl.cdiv(B, TB)

    def const2d(a):  # weights/biases: same block every step -> stay VMEM-resident
        return pl.BlockSpec(a.shape, lambda i: (0, 0))

    out = pl.pallas_call(
        critic_kernel,
        out_shape=jax.ShapeDtypeStruct((1, B), jnp.float32),
        grid=(grid,),
        in_specs=[
            pl.BlockSpec((TB, S), lambda i: (i, 0)),             # state: batch-tiled
            const2d(w1), const2d(b1),                            # weights resident
            const2d(w2), const2d(b2),
            const2d(w3),
            pl.BlockSpec(memory_space=pltpu.MemorySpace.SMEM),   # b3 scalar in SMEM
        ],
        out_specs=pl.BlockSpec((1, TB), lambda i: (0, i)),       # lane-dense output
        compiler_params=pltpu.CompilerParams(
            dimension_semantics=("parallel",)),                  # megacore split on v7x
    )(state, w1, b1, w2, b2, w3, b3)
    return out.reshape(B, 1)                                     # free row-major view


def init_params(key, state_dim):
    """Deterministic synthetic init matching the PyTorch Linear shapes.

    PyTorch stores Linear weights as (out, in); w1/w2 are stored transposed (in, out)
    so the kernel does x @ W on the MXU.  w3 keeps the PyTorch (1, 32) row layout
    because the kernel applies it via a contract-last-dims matmul.
    """
    params = {}
    for i, (din, dout) in enumerate([(state_dim, 64), (64, 32)], start=1):
        key, kw, kb = jax.random.split(key, 3)
        bound = 1.0 / jnp.sqrt(float(din))  # PyTorch default uniform(-1/sqrt(fan_in), +)
        params[f"w{i}"] = jax.random.uniform(
            kw, (din, dout), jnp.float32, minval=-bound, maxval=bound)
        params[f"b{i}"] = jax.random.uniform(
            kb, (1, dout), jnp.float32, minval=-bound, maxval=bound)
    key, kw, kb = jax.random.split(key, 3)
    bound = 1.0 / jnp.sqrt(32.0)
    params["w3"] = jax.random.uniform(kw, (1, 32), jnp.float32, minval=-bound, maxval=bound)
    params["b3"] = jax.random.uniform(kb, (1, 1), jnp.float32, minval=-bound, maxval=bound)
    return params


if __name__ == "__main__":
    key = jax.random.PRNGKey(0)
    state_dim = 16

    k_state, k_params, k_state2 = jax.random.split(key, 3)
    params = init_params(k_params, state_dim)

    def reference(s):
        h = jnp.maximum(jnp.dot(s, params["w1"], precision=_HIGHEST) + params["b1"], 0.0)
        h = jnp.maximum(jnp.dot(h, params["w2"], precision=_HIGHEST) + params["b2"], 0.0)
        return jnp.dot(h, params["w3"].T, precision=_HIGHEST) + params["b3"]

    # Small batch (single full-array block path).
    state = jax.random.normal(k_state, (8, state_dim), dtype=jnp.float32)
    value = critic_forward(state, params)
    jax.block_until_ready(value)
    assert value.shape == (8, 1)
    assert jnp.allclose(value, reference(state), atol=1e-5, rtol=1e-5)

    # Larger, non-divisible batch: exercises the tiled grid + ragged last block path
    # (TB = 384, grid = 8, last block is partial) with no wrapper-side padding.
    state2 = jax.random.normal(k_state2, (3000, state_dim), dtype=jnp.float32)
    value2 = critic_forward(state2, params)
    jax.block_until_ready(value2)
    assert value2.shape == (3000, 1)
    assert jnp.allclose(value2, reference(state2), atol=1e-5, rtol=1e-5)

    print("KERNEL_OK")
</pallas_src>

<mosaic_0001>
module attributes {stable_mosaic.version = 11 : i64} {
  func.func @critic_kernel(%arg0: i32, %arg1: memref<8x16xf32, #tpu.memory_space<vmem>>, %arg2: memref<16x64xf32, #tpu.memory_space<vmem>>, %arg3: memref<1x64xf32, #tpu.memory_space<vmem>>, %arg4: memref<64x32xf32, #tpu.memory_space<vmem>>, %arg5: memref<1x32xf32, #tpu.memory_space<vmem>>, %arg6: memref<1x32xf32, #tpu.memory_space<vmem>>, %arg7: memref<1x1xf32, #tpu.memory_space<smem>>, %arg8: memref<1x8xf32, #tpu.memory_space<vmem>>) attributes {dimension_semantics = [#tpu.dimension_semantics<parallel>], iteration_bounds = array<i64: 1>, scalar_prefetch = 0 : i64, scratch_operands = 0 : i64, tpu.core_type = #tpu.core_type<tc>, window_params = [{transform_indices = @transform_0, window_bounds = array<i64: 8, 16>}, {pipeline_mode = #tpu.pipeline_mode<synchronous>, transform_indices = @transform_1, window_bounds = array<i64: 16, 64>}, {pipeline_mode = #tpu.pipeline_mode<synchronous>, transform_indices = @transform_2, window_bounds = array<i64: 1, 64>}, {pipeline_mode = #tpu.pipeline_mode<synchronous>, transform_indices = @transform_3, window_bounds = array<i64: 64, 32>}, {pipeline_mode = #tpu.pipeline_mode<synchronous>, transform_indices = @transform_4, window_bounds = array<i64: 1, 32>}, {pipeline_mode = #tpu.pipeline_mode<synchronous>, transform_indices = @transform_5, window_bounds = array<i64: 1, 32>}, {transform_indices = @transform_6, window_bounds = array<i64: 1, 1>}, {transform_indices = @transform_7, window_bounds = array<i64: 1, 8>}]} {
    %c0 = arith.constant 0 : index
    %c0_0 = arith.constant 0 : index
    %0 = vector.load %arg1[%c0, %c0_0] : memref<8x16xf32, #tpu.memory_space<vmem>>, vector<8x16xf32>
    %c0_1 = arith.constant 0 : index
    %c0_2 = arith.constant 0 : index
    %1 = vector.load %arg2[%c0_1, %c0_2] : memref<16x64xf32, #tpu.memory_space<vmem>>, vector<16x64xf32>
    %cst = arith.constant dense<0.000000e+00> : vector<8x64xf32>
    %2 = tpu.matmul %0, %1, %cst {dimension_numbers = #tpu.dot_dimension_numbers<[1], [0], [0], [1], [0, 0, 1, 1], [], []>, precision = #tpu.contract_precision<fp32>} : vector<8x16xf32>, vector<16x64xf32>, vector<8x64xf32> -> vector<8x64xf32>
    %c0_3 = arith.constant 0 : index
    %c0_4 = arith.constant 0 : index
    %3 = vector.load %arg3[%c0_3, %c0_4] : memref<1x64xf32, #tpu.memory_space<vmem>>, vector<1x64xf32>
    %4 = vector.broadcast %3 : vector<1x64xf32> to vector<8x64xf32>
    %5 = arith.addf %2, %4 : vector<8x64xf32>
    %cst_5 = arith.constant 0.000000e+00 : f32
    %6 = vector.broadcast %cst_5 : f32 to vector<8x64xf32>
    %7 = arith.maximumf %5, %6 : vector<8x64xf32>
    %c0_6 = arith.constant 0 : index
    %c0_7 = arith.constant 0 : index
    %8 = vector.load %arg4[%c0_6, %c0_7] : memref<64x32xf32, #tpu.memory_space<vmem>>, vector<64x32xf32>
    %cst_8 = arith.constant dense<0.000000e+00> : vector<8x32xf32>
    %9 = tpu.matmul %7, %8, %cst_8 {dimension_numbers = #tpu.dot_dimension_numbers<[1], [0], [0], [1], [0, 0, 1, 1], [], []>, precision = #tpu.contract_precision<fp32>} : vector<8x64xf32>, vector<64x32xf32>, vector<8x32xf32> -> vector<8x32xf32>
    %c0_9 = arith.constant 0 : index
    %c0_10 = arith.constant 0 : index
    %10 = vector.load %arg5[%c0_9, %c0_10] : memref<1x32xf32, #tpu.memory_space<vmem>>, vector<1x32xf32>
    %11 = vector.broadcast %10 : vector<1x32xf32> to vector<8x32xf32>
    %12 = arith.addf %9, %11 : vector<8x32xf32>
    %cst_11 = arith.constant 0.000000e+00 : f32
    %13 = vector.broadcast %cst_11 : f32 to vector<8x32xf32>
    %14 = arith.maximumf %12, %13 : vector<8x32xf32>
    %c0_12 = arith.constant 0 : index
    %c0_13 = arith.constant 0 : index
    %15 = vector.load %arg6[%c0_12, %c0_13] : memref<1x32xf32, #tpu.memory_space<vmem>>, vector<1x32xf32>
    %cst_14 = arith.constant dense<0.000000e+00> : vector<1x8xf32>
    %16 = tpu.matmul %15, %14, %cst_14 {dimension_numbers = #tpu.dot_dimension_numbers<[1], [1], [0], [0], [0, 0, 1, 0], [], []>, precision = #tpu.contract_precision<fp32>} : vector<1x32xf32>, vector<8x32xf32>, vector<1x8xf32> -> vector<1x8xf32>
    %c0_15 = arith.constant 0 : index
    %c0_16 = arith.constant 0 : index
    %17 = memref.load %arg7[%c0_15, %c0_16] : memref<1x1xf32, #tpu.memory_space<smem>>
    %18 = vector.broadcast %17 : f32 to vector<1x8xf32>
    %19 = arith.addf %16, %18 : vector<1x8xf32>
    %c0_17 = arith.constant 0 : index
    %c0_18 = arith.constant 0 : index
    %20 = vector.load %arg8[%c0_17, %c0_18] : memref<1x8xf32, #tpu.memory_space<vmem>>, vector<1x8xf32>
    tpu.vector_store %arg8[%c0_17, %c0_18], %19 {strides = array<i32>} : memref<1x8xf32, #tpu.memory_space<vmem>>, vector<1x8xf32>,
    return
  }
  func.func @transform_0(%arg0: i32) -> (i32, i32) {
    %c0_i32 = arith.constant 0 : i32
    %c0_i32_0 = arith.constant 0 : i32
    return %arg0, %c0_i32 : i32, i32
  }
  func.func @transform_1(%arg0: i32) -> (i32, i32) {
    %c0_i32 = arith.constant 0 : i32
    %c0_i32_0 = arith.constant 0 : i32
    %c0_i32_1 = arith.constant 0 : i32
    return %c0_i32, %c0_i32_0 : i32, i32
  }
  func.func @transform_2(%arg0: i32) -> (i32, i32) {
    %c0_i32 = arith.constant 0 : i32
    %c0_i32_0 = arith.constant 0 : i32
    %c0_i32_1 = arith.constant 0 : i32
    return %c0_i32, %c0_i32_0 : i32, i32
  }
  func.func @transform_3(%arg0: i32) -> (i32, i32) {
    %c0_i32 = arith.constant 0 : i32
    %c0_i32_0 = arith.constant 0 : i32
    %c0_i32_1 = arith.constant 0 : i32
    return %c0_i32, %c0_i32_0 : i32, i32
  }
  func.func @transform_4(%arg0: i32) -> (i32, i32) {
    %c0_i32 = arith.constant 0 : i32
    %c0_i32_0 = arith.constant 0 : i32
    %c0_i32_1 = arith.constant 0 : i32
    return %c0_i32, %c0_i32_0 : i32, i32
  }
  func.func @transform_5(%arg0: i32) -> (i32, i32) {
    %c0_i32 = arith.constant 0 : i32
    %c0_i32_0 = arith.constant 0 : i32
    %c0_i32_1 = arith.constant 0 : i32
    return %c0_i32, %c0_i32_0 : i32, i32
  }
  func.func @transform_6(%arg0: i32) -> (i32, i32) {
    %c0_i32 = arith.constant 0 : i32
    %c0_i32_0 = arith.constant 0 : i32
    %c0_i32_1 = arith.constant 0 : i32
    return %c0_i32, %c0_i32_0 : i32, i32
  }
  func.func @transform_7(%arg0: i32) -> (i32, i32) {
    %c0_i32 = arith.constant 0 : i32
    %c0_i32_0 = arith.constant 0 : i32
    return %c0_i32, %arg0 : i32, i32
  }
}

</mosaic_0001>

<llo_original>
// kernel: tpu_custom_call.1
$region0: #{tpu_custom_call.1}
  #allocation0 [shape = 'u32[]', space=smem, size = 0x4, offset = 0x4, fixed_abs, tag = 'smem constant byte address 0x4 - core index']
  #allocation1 [shape = 'u32[144,128]{1,0:T(1,128)}', space=vmem, size = 0x12000, scoped, tag = 'internal scratch']
  #allocation2 [shape = 'f32[1,1]{1,0:T(1,128)S(6)}', space=smem, size = 0x200, scoped, tag = 'scoped memory for tpu_custom_call.1']
  %s0 = inlined_call_operand.vmem [shape: f32[8,16], index: 0, kind: input, shape index: {}]
  %s1 = inlined_call_operand.vmem [shape: f32[16,64], index: 1, kind: input, shape index: {}]
  %s2 = inlined_call_operand.vmem [shape: f32[1,64], index: 2, kind: input, shape index: {}]
  %s3 = inlined_call_operand.vmem [shape: f32[64,32], index: 3, kind: input, shape index: {}]
  %s4 = inlined_call_operand.vmem [shape: f32[1,32], index: 4, kind: input, shape index: {}]
  %s5 = inlined_call_operand.vmem [shape: f32[1,32], index: 5, kind: input, shape index: {}]
  %s6 = inlined_call_operand.<no memory space> [shape: f32[1,1], index: 6, kind: input, shape index: {}]
  %s7 = inlined_call_operand.hbm [shape: f32[1,8], index: 7, kind: output, shape index: {}]
  %s8 = sld [smem:[#allocation0]]
  $region38: #{tpu_custom_call.1} parent=0
    _
  %s10 = ssub.s32 1, %s8
  %s11 = scalar_select 0, %s10, %s8
  %12 = sst [smem:[#allocation2]] %s6
  $region1: #{tpu_custom_call.1} parent=0
    #allocation3 [shape = 'u8[512]{0}', space=vmem, size = 0x400, scoped, tag = 'output window, operand 0, single buffered']
    #allocation4 [shape = 's32[1]{0}', space=sflag, size = 0x4, scoped, tag = 'scoped memory for tpu_custom_call.1']
    %13 = vsyncpa [#allocation4], 0
    // Predicated region
    $region2: #{tpu_custom_call.1} parent=1 // pred_check
      _
    $region3: #{tpu_custom_call.1} parent=1 // pred_check_branch
      %15 = sbr.rel (0) target = $region5
    $region4: #{tpu_custom_call.1} parent=1 // pred_region
      _
    $region5: #{tpu_custom_call.1} parent=1 // pred_fallthru
      _
    // Predicated region
    $region6: #{tpu_custom_call.1} parent=1 // pred_check
      _
    $region7: #{tpu_custom_call.1} parent=1 // pred_check_branch
      %17 = sbr.rel (0) target = $region9
    $region8: #{tpu_custom_call.1} parent=1 // pred_region
      _
    $region9: #{tpu_custom_call.1} parent=1 // pred_fallthru
      _
    // Predicated region
    $region10: #{tpu_custom_call.1} parent=1 // pred_check
      _
    $region11: #{tpu_custom_call.1} parent=1 // pred_check_branch
      %19 = sbr.rel (0) target = $region13
    $region12: #{tpu_custom_call.1} parent=1 // pred_region
      _
    $region13: #{tpu_custom_call.1} parent=1 // pred_fallthru
      _
    // Predicated region
    $region14: #{tpu_custom_call.1} parent=1 // pred_check
      _
    $region15: #{tpu_custom_call.1} parent=1 // pred_check_branch
      %21 = sbr.rel (0) target = $region17
    $region16: #{tpu_custom_call.1} parent=1 // pred_region
      _
    $region17: #{tpu_custom_call.1} parent=1 // pred_fallthru
      _
    // Predicated region
    $region18: #{tpu_custom_call.1} parent=1 // pred_check
      _
    $region19: #{tpu_custom_call.1} parent=1 // pred_check_branch
      %23 = sbr.rel (0) target = $region21
    $region20: #{tpu_custom_call.1} parent=1 // pred_region
      _
    $region21: #{tpu_custom_call.1} parent=1 // pred_fallthru
      _
    // Predicated region
    $region22: #{tpu_custom_call.1} parent=1 // pred_check
      _
    $region23: #{tpu_custom_call.1} parent=1 // pred_check_branch
      %25 = sbr.rel (0) target = $region25
    $region24: #{tpu_custom_call.1} parent=1 // pred_region
      _
    $region25: #{tpu_custom_call.1} parent=1 // pred_fallthru
      _
    // Predicated region
    $region26: #{tpu_custom_call.1} parent=1 // pred_check
      _
    $region27: #{tpu_custom_call.1} parent=1 // pred_check_branch
      %27 = sbr.rel (0) target = $region29
    $region28: #{tpu_custom_call.1} parent=1 // pred_region
      _
    $region29: #{tpu_custom_call.1} parent=1 // pred_fallthru
      _
    %v28 = vld [vmem:[%s0] sm:$0xff]
    %v29 = vld [vmem:[%s1] sm:$0xff]
    %v30 = vld [vmem:[%s1 + $0x8] sm:$0xff]
    %v31 = vld [vmem:[%s2] sm:$0x1]
    %v33 = vlaneseq
    %v34 = vshrl.u32 %v33, 7
    %v35 = vsub.s32 0, %v34
    %v36 = vrot.slane %v31, %v35
    %vm38 = vcmask 130048
    %v40 = vsel %vm38, %v28, 0
    %42 = vmatprep.subr.mxu0 0.0
    %v43 = vand.u32 %v29, 4294901760
    %44 = vmatpush1.msra.mxu0 %v43
    %45 = vmatprep.subr.mxu0 0.0
    %v46 = vand.u32 %v30, 4294901760
    %47 = vmatpush1.msra.mxu0 %v46
    %48 = vmatprep.subr.mxu0 0.0
    %49 = vmatpush1.msra.mxu0 0.0
    %50 = vmatprep.subr.mxu0 0.0
    %51 = vmatpush1.msra.mxu0 0.0
    %52 = vmatprep.subr.mxu0 0.0
    %53 = vmatpush1.msra.mxu0 0.0
    %54 = vmatprep.subr.mxu0 0.0
    %55 = vmatpush1.msra.mxu0 0.0
    %56 = vmatprep.subr.mxu0 0.0
    %57 = vmatpush1.msra.mxu0 0.0
    %58 = vmatprep.subr.mxu0 0.0
    %59 = vmatpush1.msra.mxu0 0.0
    %60 = vmatprep.subr.mxu0 0.0
    %61 = vmatpush1.msra.mxu0 0.0
    %62 = vmatprep.subr.mxu0 0.0
    %63 = vmatpush1.msra.mxu0 0.0
    %64 = vmatprep.subr.mxu0 0.0
    %65 = vmatpush1.msra.mxu0 0.0
    %66 = vmatprep.subr.mxu0 0.0
    %67 = vmatpush1.msra.mxu0 0.0
    %68 = vmatprep.subr.mxu0 0.0
    %69 = vmatpush1.msra.mxu0 0.0
    %70 = vmatprep.subr.mxu0 0.0
    %71 = vmatpush1.msra.mxu0 0.0
    %72 = vmatprep.subr.mxu0 0.0
    %73 = vmatpush1.msra.mxu0 0.0
    %74 = vmatprep.subr.mxu0 0.0
    %75 = vmatpush1.msra.mxu0 0.0
    %76 = vmatprep.subr.mxu0 0.0
    %77 = vmatpush1.msra.mxu0 0.0
    %78 = vmatprep.subr.mxu0 0.0
    %79 = vmatpush1.msra.mxu0 0.0
    %80 = vmatprep.subr.mxu0 0.0
    %81 = vmatpush1.msra.mxu0 0.0
    %82 = vmatprep.subr.mxu0 0.0
    %83 = vmatpush1.msra.mxu0 0.0
    %84 = vmatprep.subr.mxu0 0.0
    %85 = vmatpush1.msra.mxu0 0.0
    %86 = vmatprep.subr.mxu0 0.0
    %87 = vmatpush1.msra.mxu0 0.0
    %88 = vmatprep.subr.mxu0 0.0
    %89 = vmatpush1.msra.mxu0 0.0
    %90 = vmatprep.subr.mxu0 0.0
    %91 = vmatpush1.msra.mxu0 0.0
    %92 = vmatprep.subr.mxu0 0.0
    %93 = vmatpush1.msra.mxu0 0.0
    %94 = vmatprep.subr.mxu0 0.0
    %95 = vmatpush1.msra.mxu0 0.0
    %96 = vmatprep.subr.mxu0 0.0
    %97 = vmatpush1.msra.mxu0 0.0
    %98 = vmatprep.subr.mxu0 0.0
    %99 = vmatpush1.msra.mxu0 0.0
    %100 = vmatprep.subr.mxu0 0.0
    %101 = vmatpush1.msra.mxu0 0.0
    %102 = vmatprep.subr.mxu0 0.0
    %103 = vmatpush1.msra.mxu0 0.0
    %104 = vmatprep.subr.mxu0 0.0
    %105 = vmatpush1.msra.mxu0 0.0
    %106 = vmatprep.subr.mxu0 0.0
    %107 = vmatpush1.msra.mxu0 0.0
    %108 = vmatprep.mubr.f32.mxu0 0.0
    %v109 = vand.u32 %v40, 4294901760
    %v110 = vsub.f32 %v40, %v109
    %v111 = vand.u32 %v110, 4294901760
    %v112 = vsub.f32 %v110, %v111
    %v113 = vand.u32 %v112, 4294901760
    %114 = vmatmul.mubr.f32.gmra.mrb[0].mxu0 %v113
    %v115 = vpop.f32.mrb[0].mxu0
    %v116 = vadd.f32 %v36, %v115
    %v117 = vpop.f32.mrb[0].mxu0
    %118 = vdwg.mxu0
    %119 = vmatprep.subr.mxu0 0.0
    %v120 = vand.u32 %v29, 4294901760
    %v121 = vsub.f32 %v29, %v120
    %v122 = vand.u32 %v121, 4294901760
    %v123 = vsub.f32 %v121, %v122
    %v124 = vand.u32 %v123, 4294901760
    %125 = vmatpush1.msra.mxu0 %v124
    %126 = vmatprep.subr.mxu0 0.0
    %v127 = vand.u32 %v30, 4294901760
    %v128 = vsub.f32 %v30, %v127
    %v129 = vand.u32 %v128, 4294901760
    %v130 = vsub.f32 %v128, %v129
    %v131 = vand.u32 %v130, 4294901760
    %132 = vmatpush1.msra.mxu0 %v131
    %133 = vmatprep.subr.mxu0 0.0
    %134 = vmatpush1.msra.mxu0 0.0
    %135 = vmatprep.subr.mxu0 0.0
    %136 = vmatpush1.msra.mxu0 0.0
    %137 = vmatprep.subr.mxu0 0.0
    %138 = vmatpush1.msra.mxu0 0.0
    %139 = vmatprep.subr.mxu0 0.0
    %140 = vmatpush1.msra.mxu0 0.0
    %141 = vmatprep.subr.mxu0 0.0
    %142 = vmatpush1.msra.mxu0 0.0
    %143 = vmatprep.subr.mxu0 0.0
    %144 = vmatpush1.msra.mxu0 0.0
    %145 = vmatprep.subr.mxu0 0.0
    %146 = vmatpush1.msra.mxu0 0.0
    %147 = vmatprep.subr.mxu0 0.0
    %148 = vmatpush1.msra.mxu0 0.0
    %149 = vmatprep.subr.mxu0 0.0
    %150 = vmatpush1.msra.mxu0 0.0
    %151 = vmatprep.subr.mxu0 0.0
    %152 = vmatpush1.msra.mxu0 0.0
    %153 = vmatprep.subr.mxu0 0.0
    %154 = vmatpush1.msra.mxu0 0.0
    %155 = vmatprep.subr.mxu0 0.0
    %156 = vmatpush1.msra.mxu0 0.0
    %157 = vmatprep.subr.mxu0 0.0
    %158 = vmatpush1.msra.mxu0 0.0
    %159 = vmatprep.subr.mxu0 0.0
    %160 = vmatpush1.msra.mxu0 0.0
    %161 = vmatprep.subr.mxu0 0.0
    %162 = vmatpush1.msra.mxu0 0.0
    %163 = vmatprep.subr.mxu0 0.0
    %164 = vmatpush1.msra.mxu0 0.0
    %165 = vmatprep.subr.mxu0 0.0
    %166 = vmatpush1.msra.mxu0 0.0
    %167 = vmatprep.subr.mxu0 0.0
    %168 = vmatpush1.msra.mxu0 0.0
    %169 = vmatprep.subr.mxu0 0.0
    %170 = vmatpush1.msra.mxu0 0.0
    %171 = vmatprep.subr.mxu0 0.0
    %172 = vmatpush1.msra.mxu0 0.0
    %173 = vmatprep.subr.mxu0 0.0
    %174 = vmatpush1.msra.mxu0 0.0
    %175 = vmatprep.subr.mxu0 0.0
    %176 = vmatpush1.msra.mxu0 0.0
    %177 = vmatprep.subr.mxu0 0.0
    %178 = vmatpush1.msra.mxu0 0.0
    %179 = vmatprep.subr.mxu0 0.0
    %180 = vmatpush1.msra.mxu0 0.0
    %181 = vmatprep.subr.mxu0 0.0
    %182 = vmatpush1.msra.mxu0 0.0
    %183 = vmatprep.subr.mxu0 0.0
    %184 = vmatpush1.msra.mxu0 0.0
    %185 = vmatprep.subr.mxu0 0.0
    %186 = vmatpush1.msra.mxu0 0.0
    %187 = vmatprep.subr.mxu0 0.0
    %188 = vmatpush1.msra.mxu0 0.0
    %189 = vmatprep.subr.mxu0 0.0
    %190 = vmatpush1.msra.mxu0 0.0
    %191 = vmatprep.subr.mxu0 0.0
    %192 = vmatpush1.msra.mxu0 0.0
    %193 = vmatprep.mubr.f32.mxu0 0.0
    %v194 = vand.u32 %v40, 4294901760
    %195 = vmatmul.mubr.f32.gmra.mrb[0].mxu0 %v194
    %v196 = vpop.f32.mrb[0].mxu0
    %v197 = vadd.f32 %v116, %v196
    %v198 = vpop.f32.mrb[0].mxu0
    %199 = vdwg.mxu0
    %200 = vmatprep.subr.mxu0 0.0
    %v201 = vand.u32 %v29, 4294901760
    %v202 = vsub.f32 %v29, %v201
    %203 = vmatpush1.msra.mxu0 %v202
    %204 = vmatprep.subr.mxu0 0.0
    %v205 = vand.u32 %v30, 4294901760
    %v206 = vsub.f32 %v30, %v205
    %207 = vmatpush1.msra.mxu0 %v206
    %208 = vmatprep.subr.mxu0 0.0
    %209 = vmatpush1.msra.mxu0 0.0
    %210 = vmatprep.subr.mxu0 0.0
    %211 = vmatpush1.msra.mxu0 0.0
    %212 = vmatprep.subr.mxu0 0.0
    %213 = vmatpush1.msra.mxu0 0.0
    %214 = vmatprep.subr.mxu0 0.0
    %215 = vmatpush1.msra.mxu0 0.0
    %216 = vmatprep.subr.mxu0 0.0
    %217 = vmatpush1.msra.mxu0 0.0
    %218 = vmatprep.subr.mxu0 0.0
    %219 = vmatpush1.msra.mxu0 0.0
    %220 = vmatprep.subr.mxu0 0.0
    %221 = vmatpush1.msra.mxu0 0.0
    %222 = vmatprep.subr.mxu0 0.0
    %223 = vmatpush1.msra.mxu0 0.0
    %224 = vmatprep.subr.mxu0 0.0
    %225 = vmatpush1.msra.mxu0 0.0
    %226 = vmatprep.subr.mxu0 0.0
    %227 = vmatpush1.msra.mxu0 0.0
    %228 = vmatprep.subr.mxu0 0.0
    %229 = vmatpush1.msra.mxu0 0.0
    %230 = vmatprep.subr.mxu0 0.0
    %231 = vmatpush1.msra.mxu0 0.0
    %232 = vmatprep.subr.mxu0 0.0
    %233 = vmatpush1.msra.mxu0 0.0
    %234 = vmatprep.subr.mxu0 0.0
    %235 = vmatpush1.msra.mxu0 0.0
    %236 = vmatprep.subr.mxu0 0.0
    %237 = vmatpush1.msra.mxu0 0.0
    %238 = vmatprep.subr.mxu0 0.0
    %239 = vmatpush1.msra.mxu0 0.0
    %240 = vmatprep.subr.mxu0 0.0
    %241 = vmatpush1.msra.mxu0 0.0
    %242 = vmatprep.subr.mxu0 0.0
    %243 = vmatpush1.msra.mxu0 0.0
    %244 = vmatprep.subr.mxu0 0.0
    %245 = vmatpush1.msra.mxu0 0.0
    %246 = vmatprep.subr.mxu0 0.0
    %247 = vmatpush1.msra.mxu0 0.0
    %248 = vmatprep.subr.mxu0 0.0
    %249 = vmatpush1.msra.mxu0 0.0
    %250 = vmatprep.subr.mxu0 0.0
    %251 = vmatpush1.msra.mxu0 0.0
    %252 = vmatprep.subr.mxu0 0.0
    %253 = vmatpush1.msra.mxu0 0.0
    %254 = vmatprep.subr.mxu0 0.0
    %255 = vmatpush1.msra.mxu0 0.0
    %256 = vmatprep.subr.mxu0 0.0
    %257 = vmatpush1.msra.mxu0 0.0
    %258 = vmatprep.subr.mxu0 0.0
    %259 = vmatpush1.msra.mxu0 0.0
    %260 = vmatprep.subr.mxu0 0.0
    %261 = vmatpush1.msra.mxu0 0.0
    %262 = vmatprep.subr.mxu0 0.0
    %263 = vmatpush1.msra.mxu0 0.0
    %264 = vmatprep.subr.mxu0 0.0
    %265 = vmatpush1.msra.mxu0 0.0
    %266 = vmatprep.subr.mxu0 0.0
    %267 = vmatpush1.msra.mxu0 0.0
    %268 = vmatprep.mubr.f32.mxu0 0.0
    %v269 = vand.u32 %v40, 4294901760
    %v270 = vsub.f32 %v40, %v269
    %271 = vmatmul.mubr.f32.gmra.mrb[0].mxu0 %v270
    %v272 = vpop.f32.mrb[0].mxu0
    %v273 = vadd.f32 %v197, %v272
    %v274 = vpop.f32.mrb[0].mxu0
    %275 = vdwg.mxu0
    %276 = vmatprep.subr.mxu0 0.0
    %v277 = vand.u32 %v29, 4294901760
    %278 = vmatpush1.msra.mxu0 %v277
    %279 = vmatprep.subr.mxu0 0.0
    %v280 = vand.u32 %v30, 4294901760
    %281 = vmatpush1.msra.mxu0 %v280
    %282 = vmatprep.subr.mxu0 0.0
    %283 = vmatpush1.msra.mxu0 0.0
    %284 = vmatprep.subr.mxu0 0.0
    %285 = vmatpush1.msra.mxu0 0.0
    %286 = vmatprep.subr.mxu0 0.0
    %287 = vmatpush1.msra.mxu0 0.0
    %288 = vmatprep.subr.mxu0 0.0
    %289 = vmatpush1.msra.mxu0 0.0
    %290 = vmatprep.subr.mxu0 0.0
    %291 = vmatpush1.msra.mxu0 0.0
    %292 = vmatprep.subr.mxu0 0.0
    %293 = vmatpush1.msra.mxu0 0.0
    %294 = vmatprep.subr.mxu0 0.0
    %295 = vmatpush1.msra.mxu0 0.0
    %296 = vmatprep.subr.mxu0 0.0
    %297 = vmatpush1.msra.mxu0 0.0
    %298 = vmatprep.subr.mxu0 0.0
    %299 = vmatpush1.msra.mxu0 0.0
    %300 = vmatprep.subr.mxu0 0.0
    %301 = vmatpush1.msra.mxu0 0.0
    %302 = vmatprep.subr.mxu0 0.0
    %303 = vmatpush1.msra.mxu0 0.0
    %304 = vmatprep.subr.mxu0 0.0
    %305 = vmatpush1.msra.mxu0 0.0
    %306 = vmatprep.subr.mxu0 0.0
    %307 = vmatpush1.msra.mxu0 0.0
    %308 = vmatprep.subr.mxu0 0.0
    %309 = vmatpush1.msra.mxu0 0.0
    %310 = vmatprep.subr.mxu0 0.0
    %311 = vmatpush1.msra.mxu0 0.0
    %312 = vmatprep.subr.mxu0 0.0
    %313 = vmatpush1.msra.mxu0 0.0
    %314 = vmatprep.subr.mxu0 0.0
    %315 = vmatpush1.msra.mxu0 0.0
    %316 = vmatprep.subr.mxu0 0.0
    %317 = vmatpush1.msra.mxu0 0.0
    %318 = vmatprep.subr.mxu0 0.0
    %319 = vmatpush1.msra.mxu0 0.0
    %320 = vmatprep.subr.mxu0 0.0
    %321 = vmatpush1.msra.mxu0 0.0
    %322 = vmatprep.subr.mxu0 0.0
    %323 = vmatpush1.msra.mxu0 0.0
    %324 = vmatprep.subr.mxu0 0.0
    %325 = vmatpush1.msra.mxu0 0.0
    %326 = vmatprep.subr.mxu0 0.0
    %327 = vmatpush1.msra.mxu0 0.0
    %328 = vmatprep.subr.mxu0 0.0
    %329 = vmatpush1.msra.mxu0 0.0
    %330 = vmatprep.subr.mxu0 0.0
    %331 = vmatpush1.msra.mxu0 0.0
    %332 = vmatprep.subr.mxu0 0.0
    %333 = vmatpush1.msra.mxu0 0.0
    %334 = vmatprep.subr.mxu0 0.0
    %335 = vmatpush1.msra.mxu0 0.0
    %336 = vmatprep.subr.mxu0 0.0
    %337 = vmatpush1.msra.mxu0 0.0
    %338 = vmatprep.subr.mxu0 0.0
    %339 = vmatpush1.msra.mxu0 0.0
    %340 = vmatprep.subr.mxu0 0.0
    %341 = vmatpush1.msra.mxu0 0.0
    %342 = vmatprep.mubr.f32.mxu0 0.0
    %v343 = vand.u32 %v40, 4294901760
    %v344 = vsub.f32 %v40, %v343
    %v345 = vand.u32 %v344, 4294901760
    %346 = vmatmul.mubr.f32.gmra.mrb[0].mxu0 %v345
    %v347 = vpop.f32.mrb[0].mxu0
    %v348 = vadd.f32 %v273, %v347
    %v349 = vpop.f32.mrb[0].mxu0
    %350 = vdwg.mxu0
    %351 = vmatprep.subr.mxu0 0.0
    %v352 = vand.u32 %v29, 4294901760
    %v353 = vsub.f32 %v29, %v352
    %v354 = vand.u32 %v353, 4294901760
    %355 = vmatpush1.msra.mxu0 %v354
    %356 = vmatprep.subr.mxu0 0.0
    %v357 = vand.u32 %v30, 4294901760
    %v358 = vsub.f32 %v30, %v357
    %v359 = vand.u32 %v358, 4294901760
    %360 = vmatpush1.msra.mxu0 %v359
    %361 = vmatprep.subr.mxu0 0.0
    %362 = vmatpush1.msra.mxu0 0.0
    %363 = vmatprep.subr.mxu0 0.0
    %364 = vmatpush1.msra.mxu0 0.0
    %365 = vmatprep.subr.mxu0 0.0
    %366 = vmatpush1.msra.mxu0 0.0
    %367 = vmatprep.subr.mxu0 0.0
    %368 = vmatpush1.msra.mxu0 0.0
    %369 = vmatprep.subr.mxu0 0.0
    %370 = vmatpush1.msra.mxu0 0.0
    %371 = vmatprep.subr.mxu0 0.0
    %372 = vmatpush1.msra.mxu0 0.0
    %373 = vmatprep.subr.mxu0 0.0
    %374 = vmatpush1.msra.mxu0 0.0
    %375 = vmatprep.subr.mxu0 0.0
    %376 = vmatpush1.msra.mxu0 0.0
    %377 = vmatprep.subr.mxu0 0.0
    %378 = vmatpush1.msra.mxu0 0.0
    %379 = vmatprep.subr.mxu0 0.0
    %380 = vmatpush1.msra.mxu0 0.0
    %381 = vmatprep.subr.mxu0 0.0
    %382 = vmatpush1.msra.mxu0 0.0
    %383 = vmatprep.subr.mxu0 0.0
    %384 = vmatpush1.msra.mxu0 0.0
    %385 = vmatprep.subr.mxu0 0.0
    %386 = vmatpush1.msra.mxu0 0.0
    %387 = vmatprep.subr.mxu0 0.0
    %388 = vmatpush1.msra.mxu0 0.0
    %389 = vmatprep.subr.mxu0 0.0
    %390 = vmatpush1.msra.mxu0 0.0
    %391 = vmatprep.subr.mxu0 0.0
    %392 = vmatpush1.msra.mxu0 0.0
    %393 = vmatprep.subr.mxu0 0.0
    %394 = vmatpush1.msra.mxu0 0.0
    %395 = vmatprep.subr.mxu0 0.0
    %396 = vmatpush1.msra.mxu0 0.0
    %397 = vmatprep.subr.mxu0 0.0
    %398 = vmatpush1.msra.mxu0 0.0
    %399 = vmatprep.subr.mxu0 0.0
    %400 = vmatpush1.msra.mxu0 0.0
    %401 = vmatprep.subr.mxu0 0.0
    %402 = vmatpush1.msra.mxu0 0.0
    %403 = vmatprep.subr.mxu0 0.0
    %404 = vmatpush1.msra.mxu0 0.0
    %405 = vmatprep.subr.mxu0 0.0
    %406 = vmatpush1.msra.mxu0 0.0
    %407 = vmatprep.subr.mxu0 0.0
    %408 = vmatpush1.msra.mxu0 0.0
    %409 = vmatprep.subr.mxu0 0.0
    %410 = vmatpush1.msra.mxu0 0.0
    %411 = vmatprep.subr.mxu0 0.0
    %412 = vmatpush1.msra.mxu0 0.0
    %413 = vmatprep.subr.mxu0 0.0
    %414 = vmatpush1.msra.mxu0 0.0
    %415 = vmatprep.subr.mxu0 0.0
    %416 = vmatpush1.msra.mxu0 0.0
    %417 = vmatprep.subr.mxu0 0.0
    %418 = vmatpush1.msra.mxu0 0.0
    %419 = vmatprep.subr.mxu0 0.0
    %420 = vmatpush1.msra.mxu0 0.0
    %421 = vmatprep.mubr.f32.mxu0 0.0
    %v422 = vand.u32 %v40, 4294901760
    %423 = vmatmul.mubr.f32.gmra.mrb[0].mxu0 %v422
    %v424 = vpop.f32.mrb[0].mxu0
    %v425 = vadd.f32 %v348, %v424
    %v426 = vpop.f32.mrb[0].mxu0
    %427 = vdwg.mxu0
    %428 = vmatprep.subr.mxu0 0.0
    %v429 = vand.u32 %v29, 4294901760
    %430 = vmatpush1.msra.mxu0 %v429
    %431 = vmatprep.subr.mxu0 0.0
    %v432 = vand.u32 %v30, 4294901760
    %433 = vmatpush1.msra.mxu0 %v432
    %434 = vmatprep.subr.mxu0 0.0
    %435 = vmatpush1.msra.mxu0 0.0
    %436 = vmatprep.subr.mxu0 0.0
    %437 = vmatpush1.msra.mxu0 0.0
    %438 = vmatprep.subr.mxu0 0.0
    %439 = vmatpush1.msra.mxu0 0.0
    %440 = vmatprep.subr.mxu0 0.0
    %441 = vmatpush1.msra.mxu0 0.0
    %442 = vmatprep.subr.mxu0 0.0
    %443 = vmatpush1.msra.mxu0 0.0
    %444 = vmatprep.subr.mxu0 0.0
    %445 = vmatpush1.msra.mxu0 0.0
    %446 = vmatprep.subr.mxu0 0.0
    %447 = vmatpush1.msra.mxu0 0.0
    %448 = vmatprep.subr.mxu0 0.0
    %449 = vmatpush1.msra.mxu0 0.0
    %450 = vmatprep.subr.mxu0 0.0
    %451 = vmatpush1.msra.mxu0 0.0
    %452 = vmatprep.subr.mxu0 0.0
    %453 = vmatpush1.msra.mxu0 0.0
    %454 = vmatprep.subr.mxu0 0.0
    %455 = vmatpush1.msra.mxu0 0.0
    %456 = vmatprep.subr.mxu0 0.0
    %457 = vmatpush1.msra.mxu0 0.0
    %458 = vmatprep.subr.mxu0 0.0
    %459 = vmatpush1.msra.mxu0 0.0
    %460 = vmatprep.subr.mxu0 0.0
    %461 = vmatpush1.msra.mxu0 0.0
    %462 = vmatprep.subr.mxu0 0.0
    %463 = vmatpush1.msra.mxu0 0.0
    %464 = vmatprep.subr.mxu0 0.0
    %465 = vmatpush1.msra.mxu0 0.0
    %466 = vmatprep.subr.mxu0 0.0
    %467 = vmatpush1.msra.mxu0 0.0
    %468 = vmatprep.subr.mxu0 0.0
    %469 = vmatpush1.msra.mxu0 0.0
    %470 = vmatprep.subr.mxu0 0.0
    %471 = vmatpush1.msra.mxu0 0.0
    %472 = vmatprep.subr.mxu0 0.0
    %473 = vmatpush1.msra.mxu0 0.0
    %474 = vmatprep.subr.mxu0 0.0
    %475 = vmatpush1.msra.mxu0 0.0
    %476 = vmatprep.subr.mxu0 0.0
    %477 = vmatpush1.msra.mxu0 0.0
    %478 = vmatprep.subr.mxu0 0.0
    %479 = vmatpush1.msra.mxu0 0.0
    %480 = vmatprep.subr.mxu0 0.0
    %481 = vmatpush1.msra.mxu0 0.0
    %482 = vmatprep.subr.mxu0 0.0
    %483 = vmatpush1.msra.mxu0 0.0
    %484 = vmatprep.subr.mxu0 0.0
    %485 = vmatpush1.msra.mxu0 0.0
    %486 = vmatprep.subr.mxu0 0.0
    %487 = vmatpush1.msra.mxu0 0.0
    %488 = vmatprep.subr.mxu0 0.0
    %489 = vmatpush1.msra.mxu0 0.0
    %490 = vmatprep.subr.mxu0 0.0
    %491 = vmatpush1.msra.mxu0 0.0
    %492 = vmatprep.subr.mxu0 0.0
    %493 = vmatpush1.msra.mxu0 0.0
    %494 = vmatprep.mubr.f32.mxu0 0.0
    %v495 = vand.u32 %v40, 4294901760
    %496 = vmatmul.mubr.f32.gmra.mrb[0].mxu0 %v495
    %v497 = vpop.f32.mrb[0].mxu0
    %v498 = vadd.f32 %v425, %v497
    %v499 = vpop.f32.mrb[0].mxu0
    %500 = vdwg.mxu0
    %v501 = vmax.f32 %v498, 0.0
    %v502 = vld [vmem:[%s3] sm:$0xff]
    %v503 = vld [vmem:[%s3 + $0x8] sm:$0xff]
    %v504 = vld [vmem:[%s3 + $0x10] sm:$0xff]
    %v505 = vld [vmem:[%s3 + $0x18] sm:$0xff]
    %v506 = vld [vmem:[%s3 + $0x20] sm:$0xff]
    %v507 = vld [vmem:[%s3 + $0x28] sm:$0xff]
    %v508 = vld [vmem:[%s3 + $0x30] sm:$0xff]
    %v509 = vld [vmem:[%s3 + $0x38] sm:$0xff]
    %v510 = vld [vmem:[%s4] sm:$0x1]
    %v512 = vlaneseq
    %v513 = vshrl.u32 %v512, 7
    %v514 = vsub.s32 0, %v513
    %v515 = vrot.slane %v510, %v514
    %vm517 = vcmask 523264
    %v519 = vsel %vm517, %v501, 0
    %521 = vmatprep.subr.mxu0 0.0
    %v522 = vand.u32 %v502, 4294901760
    %523 = vmatpush1.msra.mxu0 %v522
    %524 = vmatprep.subr.mxu0 0.0
    %v525 = vand.u32 %v503, 4294901760
    %526 = vmatpush1.msra.mxu0 %v525
    %527 = vmatprep.subr.mxu0 0.0
    %v528 = vand.u32 %v504, 4294901760
    %529 = vmatpush1.msra.mxu0 %v528
    %530 = vmatprep.subr.mxu0 0.0
    %v531 = vand.u32 %v505, 4294901760
    %532 = vmatpush1.msra.mxu0 %v531
    %533 = vmatprep.subr.mxu0 0.0
    %v534 = vand.u32 %v506, 4294901760
    %535 = vmatpush1.msra.mxu0 %v534
    %536 = vmatprep.subr.mxu0 0.0
    %v537 = vand.u32 %v507, 4294901760
    %538 = vmatpush1.msra.mxu0 %v537
    %539 = vmatprep.subr.mxu0 0.0
    %v540 = vand.u32 %v508, 4294901760
    %541 = vmatpush1.msra.mxu0 %v540
    %542 = vmatprep.subr.mxu0 0.0
    %v543 = vand.u32 %v509, 4294901760
    %544 = vmatpush1.msra.mxu0 %v543
    %545 = vmatprep.subr.mxu0 0.0
    %546 = vmatpush1.msra.mxu0 0.0
    %547 = vmatprep.subr.mxu0 0.0
    %548 = vmatpush1.msra.mxu0 0.0
    %549 = vmatprep.subr.mxu0 0.0
    %550 = vmatpush1.msra.mxu0 0.0
    %551 = vmatprep.subr.mxu0 0.0
    %552 = vmatpush1.msra.mxu0 0.0
    %553 = vmatprep.subr.mxu0 0.0
    %554 = vmatpush1.msra.mxu0 0.0
    %555 = vmatprep.subr.mxu0 0.0
    %556 = vmatpush1.msra.mxu0 0.0
    %557 = vmatprep.subr.mxu0 0.0
    %558 = vmatpush1.msra.mxu0 0.0
    %559 = vmatprep.subr.mxu0 0.0
    %560 = vmatpush1.msra.mxu0 0.0
    %561 = vmatprep.subr.mxu0 0.0
    %562 = vmatpush1.msra.mxu0 0.0
    %563 = vmatprep.subr.mxu0 0.0
    %564 = vmatpush1.msra.mxu0 0.0
    %565 = vmatprep.subr.mxu0 0.0
    %566 = vmatpush1.msra.mxu0 0.0
    %567 = vmatprep.subr.mxu0 0.0
    %568 = vmatpush1.msra.mxu0 0.0
    %569 = vmatprep.subr.mxu0 0.0
    %570 = vmatpush1.msra.mxu0 0.0
    %571 = vmatprep.subr.mxu0 0.0
    %572 = vmatpush1.msra.mxu0 0.0
    %573 = vmatprep.subr.mxu0 0.0
    %574 = vmatpush1.msra.mxu0 0.0
    %575 = vmatprep.subr.mxu0 0.0
    %576 = vmatpush1.msra.mxu0 0.0
    %577 = vmatprep.subr.mxu0 0.0
    %578 = vmatpush1.msra.mxu0 0.0
    %579 = vmatprep.subr.mxu0 0.0
    %580 = vmatpush1.msra.mxu0 0.0
    %581 = vmatprep.subr.mxu0 0.0
    %582 = vmatpush1.msra.mxu0 0.0
    %583 = vmatprep.subr.mxu0 0.0
    %584 = vmatpush1.msra.mxu0 0.0
    %585 = vmatprep.subr.mxu0 0.0
    %586 = vmatpush1.msra.mxu0 0.0
    %587 = vmatprep.subr.mxu0 0.0
    %588 = vmatpush1.msra.mxu0 0.0
    %589 = vmatprep.subr.mxu0 0.0
    %590 = vmatpush1.msra.mxu0 0.0
    %591 = vmatprep.subr.mxu0 0.0
    %592 = vmatpush1.msra.mxu0 0.0
    %593 = vmatprep.mubr.f32.mxu0 0.0
    %v594 = vand.u32 %v519, 4294901760
    %v595 = vsub.f32 %v519, %v594
    %v596 = vand.u32 %v595, 4294901760
    %v597 = vsub.f32 %v595, %v596
    %v598 = vand.u32 %v597, 4294901760
    %599 = vmatmul.mubr.f32.gmra.mrb[0].mxu0 %v598
    %v600 = vpop.f32.mrb[0].mxu0
    %v601 = vadd.f32 %v515, %v600
    %v602 = vpop.f32.mrb[0].mxu0
    %603 = vdwg.mxu0
    %604 = vmatprep.subr.mxu0 0.0
    %v605 = vand.u32 %v502, 4294901760
    %v606 = vsub.f32 %v502, %v605
    %v607 = vand.u32 %v606, 4294901760
    %v608 = vsub.f32 %v606, %v607
    %v609 = vand.u32 %v608, 4294901760
    %610 = vmatpush1.msra.mxu0 %v609
    %611 = vmatprep.subr.mxu0 0.0
    %v612 = vand.u32 %v503, 4294901760
    %v613 = vsub.f32 %v503, %v612
    %v614 = vand.u32 %v613, 4294901760
    %v615 = vsub.f32 %v613, %v614
    %v616 = vand.u32 %v615, 4294901760
    %617 = vmatpush1.msra.mxu0 %v616
    %618 = vmatprep.subr.mxu0 0.0
    %v619 = vand.u32 %v504, 4294901760
    %v620 = vsub.f32 %v504, %v619
    %v621 = vand.u32 %v620, 4294901760
    %v622 = vsub.f32 %v620, %v621
    %v623 = vand.u32 %v622, 4294901760
    %624 = vmatpush1.msra.mxu0 %v623
    %625 = vmatprep.subr.mxu0 0.0
    %v626 = vand.u32 %v505, 4294901760
    %v627 = vsub.f32 %v505, %v626
    %v628 = vand.u32 %v627, 4294901760
    %v629 = vsub.f32 %v627, %v628
    %v630 = vand.u32 %v629, 4294901760
    %631 = vmatpush1.msra.mxu0 %v630
    %632 = vmatprep.subr.mxu0 0.0
    %v633 = vand.u32 %v506, 4294901760
    %v634 = vsub.f32 %v506, %v633
    %v635 = vand.u32 %v634, 4294901760
    %v636 = vsub.f32 %v634, %v635
    %v637 = vand.u32 %v636, 4294901760
    %638 = vmatpush1.msra.mxu0 %v637
    %639 = vmatprep.subr.mxu0 0.0
    %v640 = vand.u32 %v507, 4294901760
    %v641 = vsub.f32 %v507, %v640
    %v642 = vand.u32 %v641, 4294901760
    %v643 = vsub.f32 %v641, %v642
    %v644 = vand.u32 %v643, 4294901760
    %645 = vmatpush1.msra.mxu0 %v644
    %646 = vmatprep.subr.mxu0 0.0
    %v647 = vand.u32 %v508, 4294901760
    %v648 = vsub.f32 %v508, %v647
    %v649 = vand.u32 %v648, 4294901760
    %v650 = vsub.f32 %v648, %v649
    %v651 = vand.u32 %v650, 4294901760
    %652 = vmatpush1.msra.mxu0 %v651
    %653 = vmatprep.subr.mxu0 0.0
    %v654 = vand.u32 %v509, 4294901760
    %v655 = vsub.f32 %v509, %v654
    %v656 = vand.u32 %v655, 4294901760
    %v657 = vsub.f32 %v655, %v656
    %v658 = vand.u32 %v657, 4294901760
    %659 = vmatpush1.msra.mxu0 %v658
    %660 = vmatprep.subr.mxu0 0.0
    %661 = vmatpush1.msra.mxu0 0.0
    %662 = vmatprep.subr.mxu0 0.0
    %663 = vmatpush1.msra.mxu0 0.0
    %664 = vmatprep.subr.mxu0 0.0
    %665 = vmatpush1.msra.mxu0 0.0
    %666 = vmatprep.subr.mxu0 0.0
    %667 = vmatpush1.msra.mxu0 0.0
    %668 = vmatprep.subr.mxu0 0.0
    %669 = vmatpush1.msra.mxu0 0.0
    %670 = vmatprep.subr.mxu0 0.0
    %671 = vmatpush1.msra.mxu0 0.0
    %672 = vmatprep.subr.mxu0 0.0
    %673 = vmatpush1.msra.mxu0 0.0
    %674 = vmatprep.subr.mxu0 0.0
    %675 = vmatpush1.msra.mxu0 0.0
    %676 = vmatprep.subr.mxu0 0.0
    %677 = vmatpush1.msra.mxu0 0.0
    %678 = vmatprep.subr.mxu0 0.0
    %679 = vmatpush1.msra.mxu0 0.0
    %680 = vmatprep.subr.mxu0 0.0
    %681 = vmatpush1.msra.mxu0 0.0
    %682 = vmatprep.subr.mxu0 0.0
    %683 = vmatpush1.msra.mxu0 0.0
    %684 = vmatprep.subr.mxu0 0.0
    %685 = vmatpush1.msra.mxu0 0.0
    %686 = vmatprep.subr.mxu0 0.0
    %687 = vmatpush1.msra.mxu0 0.0
    %688 = vmatprep.subr.mxu0 0.0
    %689 = vmatpush1.msra.mxu0 0.0
    %690 = vmatprep.subr.mxu0 0.0
    %691 = vmatpush1.msra.mxu0 0.0
    %692 = vmatprep.subr.mxu0 0.0
    %693 = vmatpush1.msra.mxu0 0.0
    %694 = vmatprep.subr.mxu0 0.0
    %695 = vmatpush1.msra.mxu0 0.0
    %696 = vmatprep.subr.mxu0 0.0
    %697 = vmatpush1.msra.mxu0 0.0
    %698 = vmatprep.subr.mxu0 0.0
    %699 = vmatpush1.msra.mxu0 0.0
    %700 = vmatprep.subr.mxu0 0.0
    %701 = vmatpush1.msra.mxu0 0.0
    %702 = vmatprep.subr.mxu0 0.0
    %703 = vmatpush1.msra.mxu0 0.0
    %704 = vmatprep.subr.mxu0 0.0
    %705 = vmatpush1.msra.mxu0 0.0
    %706 = vmatprep.subr.mxu0 0.0
    %707 = vmatpush1.msra.mxu0 0.0
    %708 = vmatprep.mubr.f32.mxu0 0.0
    %v709 = vand.u32 %v519, 4294901760
    %710 = vmatmul.mubr.f32.gmra.mrb[0].mxu0 %v709
    %v711 = vpop.f32.mrb[0].mxu0
    %v712 = vadd.f32 %v601, %v711
    %v713 = vpop.f32.mrb[0].mxu0
    %714 = vdwg.mxu0
    %715 = vmatprep.subr.mxu0 0.0
    %v716 = vand.u32 %v502, 4294901760
    %v717 = vsub.f32 %v502, %v716
    %718 = vmatpush1.msra.mxu0 %v717
    %719 = vmatprep.subr.mxu0 0.0
    %v720 = vand.u32 %v503, 4294901760
    %v721 = vsub.f32 %v503, %v720
    %722 = vmatpush1.msra.mxu0 %v721
    %723 = vmatprep.subr.mxu0 0.0
    %v724 = vand.u32 %v504, 4294901760
    %v725 = vsub.f32 %v504, %v724
    %726 = vmatpush1.msra.mxu0 %v725
    %727 = vmatprep.subr.mxu0 0.0
    %v728 = vand.u32 %v505, 4294901760
    %v729 = vsub.f32 %v505, %v728
    %730 = vmatpush1.msra.mxu0 %v729
    %731 = vmatprep.subr.mxu0 0.0
    %v732 = vand.u32 %v506, 4294901760
    %v733 = vsub.f32 %v506, %v732
    %734 = vmatpush1.msra.mxu0 %v733
    %735 = vmatprep.subr.mxu0 0.0
    %v736 = vand.u32 %v507, 4294901760
    %v737 = vsub.f32 %v507, %v736
    %738 = vmatpush1.msra.mxu0 %v737
    %739 = vmatprep.subr.mxu0 0.0
    %v740 = vand.u32 %v508, 4294901760
    %v741 = vsub.f32 %v508, %v740
    %742 = vmatpush1.msra.mxu0 %v741
    %743 = vmatprep.subr.mxu0 0.0
    %v744 = vand.u32 %v509, 4294901760
    %v745 = vsub.f32 %v509, %v744
    %746 = vmatpush1.msra.mxu0 %v745
    %747 = vmatprep.subr.mxu0 0.0
    %748 = vmatpush1.msra.mxu0 0.0
    %749 = vmatprep.subr.mxu0 0.0
    %750 = vmatpush1.msra.mxu0 0.0
    %751 = vmatprep.subr.mxu0 0.0
    %752 = vmatpush1.msra.mxu0 0.0
    %753 = vmatprep.subr.mxu0 0.0
    %754 = vmatpush1.msra.mxu0 0.0
    %755 = vmatprep.subr.mxu0 0.0
    %756 = vmatpush1.msra.mxu0 0.0
    %757 = vmatprep.subr.mxu0 0.0
    %758 = vmatpush1.msra.mxu0 0.0
    %759 = vmatprep.subr.mxu0 0.0
    %760 = vmatpush1.msra.mxu0 0.0
    %761 = vmatprep.subr.mxu0 0.0
    %762 = vmatpush1.msra.mxu0 0.0
    %763 = vmatprep.subr.mxu0 0.0
    %764 = vmatpush1.msra.mxu0 0.0
    %765 = vmatprep.subr.mxu0 0.0
    %766 = vmatpush1.msra.mxu0 0.0
    %767 = vmatprep.subr.mxu0 0.0
    %768 = vmatpush1.msra.mxu0 0.0
    %769 = vmatprep.subr.mxu0 0.0
    %770 = vmatpush1.msra.mxu0 0.0
    %771 = vmatprep.subr.mxu0 0.0
    %772 = vmatpush1.msra.mxu0 0.0
    %773 = vmatprep.subr.mxu0 0.0
    %774 = vmatpush1.msra.mxu0 0.0
    %775 = vmatprep.subr.mxu0 0.0
    %776 = vmatpush1.msra.mxu0 0.0
    %777 = vmatprep.subr.mxu0 0.0
    %778 = vmatpush1.msra.mxu0 0.0
    %779 = vmatprep.subr.mxu0 0.0
    %780 = vmatpush1.msra.mxu0 0.0
    %781 = vmatprep.subr.mxu0 0.0
    %782 = vmatpush1.msra.mxu0 0.0
    %783 = vmatprep.subr.mxu0 0.0
    %784 = vmatpush1.msra.mxu0 0.0
    %785 = vmatprep.subr.mxu0 0.0
    %786 = vmatpush1.msra.mxu0 0.0
    %787 = vmatprep.subr.mxu0 0.0
    %788 = vmatpush1.msra.mxu0 0.0
    %789 = vmatprep.subr.mxu0 0.0
    %790 = vmatpush1.msra.mxu0 0.0
    %791 = vmatprep.subr.mxu0 0.0
    %792 = vmatpush1.msra.mxu0 0.0
    %793 = vmatprep.subr.mxu0 0.0
    %794 = vmatpush1.msra.mxu0 0.0
    %795 = vmatprep.mubr.f32.mxu0 0.0
    %v796 = vand.u32 %v519, 4294901760
    %v797 = vsub.f32 %v519, %v796
    %798 = vmatmul.mubr.f32.gmra.mrb[0].mxu0 %v797
    %v799 = vpop.f32.mrb[0].mxu0
    %v800 = vadd.f32 %v712, %v799
    %v801 = vpop.f32.mrb[0].mxu0
    %802 = vdwg.mxu0
    %803 = vmatprep.subr.mxu0 0.0
    %v804 = vand.u32 %v502, 4294901760
    %805 = vmatpush1.msra.mxu0 %v804
    %806 = vmatprep.subr.mxu0 0.0
    %v807 = vand.u32 %v503, 4294901760
    %808 = vmatpush1.msra.mxu0 %v807
    %809 = vmatprep.subr.mxu0 0.0
    %v810 = vand.u32 %v504, 4294901760
    %811 = vmatpush1.msra.mxu0 %v810
    %812 = vmatprep.subr.mxu0 0.0
    %v813 = vand.u32 %v505, 4294901760
    %814 = vmatpush1.msra.mxu0 %v813
    %815 = vmatprep.subr.mxu0 0.0
    %v816 = vand.u32 %v506, 4294901760
    %817 = vmatpush1.msra.mxu0 %v816
    %818 = vmatprep.subr.mxu0 0.0
    %v819 = vand.u32 %v507, 4294901760
    %820 = vmatpush1.msra.mxu0 %v819
    %821 = vmatprep.subr.mxu0 0.0
    %v822 = vand.u32 %v508, 4294901760
    %823 = vmatpush1.msra.mxu0 %v822
    %824 = vmatprep.subr.mxu0 0.0
    %v825 = vand.u32 %v509, 4294901760
    %826 = vmatpush1.msra.mxu0 %v825
    %827 = vmatprep.subr.mxu0 0.0
    %828 = vmatpush1.msra.mxu0 0.0
    %829 = vmatprep.subr.mxu0 0.0
    %830 = vmatpush1.msra.mxu0 0.0
    %831 = vmatprep.subr.mxu0 0.0
    %832 = vmatpush1.msra.mxu0 0.0
    %833 = vmatprep.subr.mxu0 0.0
    %834 = vmatpush1.msra.mxu0 0.0
    %835 = vmatprep.subr.mxu0 0.0
    %836 = vmatpush1.msra.mxu0 0.0
    %837 = vmatprep.subr.mxu0 0.0
    %838 = vmatpush1.msra.mxu0 0.0
    %839 = vmatprep.subr.mxu0 0.0
    %840 = vmatpush1.msra.mxu0 0.0
    %841 = vmatprep.subr.mxu0 0.0
    %842 = vmatpush1.msra.mxu0 0.0
    %843 = vmatprep.subr.mxu0 0.0
    %844 = vmatpush1.msra.mxu0 0.0
    %845 = vmatprep.subr.mxu0 0.0
    %846 = vmatpush1.msra.mxu0 0.0
    %847 = vmatprep.subr.mxu0 0.0
    %848 = vmatpush1.msra.mxu0 0.0
    %849 = vmatprep.subr.mxu0 0.0
    %850 = vmatpush1.msra.mxu0 0.0
    %851 = vmatprep.subr.mxu0 0.0
    %852 = vmatpush1.msra.mxu0 0.0
    %853 = vmatprep.subr.mxu0 0.0
    %854 = vmatpush1.msra.mxu0 0.0
    %855 = vmatprep.subr.mxu0 0.0
    %856 = vmatpush1.msra.mxu0 0.0
    %857 = vmatprep.subr.mxu0 0.0
    %858 = vmatpush1.msra.mxu0 0.0
    %859 = vmatprep.subr.mxu0 0.0
    %860 = vmatpush1.msra.mxu0 0.0
    %861 = vmatprep.subr.mxu0 0.0
    %862 = vmatpush1.msra.mxu0 0.0
    %863 = vmatprep.subr.mxu0 0.0
    %864 = vmatpush1.msra.mxu0 0.0
    %865 = vmatprep.subr.mxu0 0.0
    %866 = vmatpush1.msra.mxu0 0.0
    %867 = vmatprep.subr.mxu0 0.0
    %868 = vmatpush1.msra.mxu0 0.0
    %869 = vmatprep.subr.mxu0 0.0
    %870 = vmatpush1.msra.mxu0 0.0
    %871 = vmatprep.subr.mxu0 0.0
    %872 = vmatpush1.msra.mxu0 0.0
    %873 = vmatprep.subr.mxu0 0.0
    %874 = vmatpush1.msra.mxu0 0.0
    %875 = vmatprep.mubr.f32.mxu0 0.0
    %v876 = vand.u32 %v519, 4294901760
    %v877 = vsub.f32 %v519, %v876
    %v878 = vand.u32 %v877, 4294901760
    %879 = vmatmul.mubr.f32.gmra.mrb[0].mxu0 %v878
    %v880 = vpop.f32.mrb[0].mxu0
    %v881 = vadd.f32 %v800, %v880
    %v882 = vpop.f32.mrb[0].mxu0
    %883 = vdwg.mxu0
    %884 = vmatprep.subr.mxu0 0.0
    %v885 = vand.u32 %v502, 4294901760
    %v886 = vsub.f32 %v502, %v885
    %v887 = vand.u32 %v886, 4294901760
    %888 = vmatpush1.msra.mxu0 %v887
    %889 = vmatprep.subr.mxu0 0.0
    %v890 = vand.u32 %v503, 4294901760
    %v891 = vsub.f32 %v503, %v890
    %v892 = vand.u32 %v891, 4294901760
    %893 = vmatpush1.msra.mxu0 %v892
    %894 = vmatprep.subr.mxu0 0.0
    %v895 = vand.u32 %v504, 4294901760
    %v896 = vsub.f32 %v504, %v895
    %v897 = vand.u32 %v896, 4294901760
    %898 = vmatpush1.msra.mxu0 %v897
    %899 = vmatprep.subr.mxu0 0.0
    %v900 = vand.u32 %v505, 4294901760
    %v901 = vsub.f32 %v505, %v900
    %v902 = vand.u32 %v901, 4294901760
    %903 = vmatpush1.msra.mxu0 %v902
    %904 = vmatprep.subr.mxu0 0.0
    %v905 = vand.u32 %v506, 4294901760
    %v906 = vsub.f32 %v506, %v905
    %v907 = vand.u32 %v906, 4294901760
    %908 = vmatpush1.msra.mxu0 %v907
    %909 = vmatprep.subr.mxu0 0.0
    %v910 = vand.u32 %v507, 4294901760
    %v911 = vsub.f32 %v507, %v910
    %v912 = vand.u32 %v911, 4294901760
    %913 = vmatpush1.msra.mxu0 %v912
    %914 = vmatprep.subr.mxu0 0.0
    %v915 = vand.u32 %v508, 4294901760
    %v916 = vsub.f32 %v508, %v915
    %v917 = vand.u32 %v916, 4294901760
    %918 = vmatpush1.msra.mxu0 %v917
    %919 = vmatprep.subr.mxu0 0.0
    %v920 = vand.u32 %v509, 4294901760
    %v921 = vsub.f32 %v509, %v920
    %v922 = vand.u32 %v921, 4294901760
    %923 = vmatpush1.msra.mxu0 %v922
    %924 = vmatprep.subr.mxu0 0.0
    %925 = vmatpush1.msra.mxu0 0.0
    %926 = vmatprep.subr.mxu0 0.0
    %927 = vmatpush1.msra.mxu0 0.0
    %928 = vmatprep.subr.mxu0 0.0
    %929 = vmatpush1.msra.mxu0 0.0
    %930 = vmatprep.subr.mxu0 0.0
    %931 = vmatpush1.msra.mxu0 0.0
    %932 = vmatprep.subr.mxu0 0.0
    %933 = vmatpush1.msra.mxu0 0.0
    %934 = vmatprep.subr.mxu0 0.0
    %935 = vmatpush1.msra.mxu0 0.0
    %936 = vmatprep.subr.mxu0 0.0
    %937 = vmatpush1.msra.mxu0 0.0
    %938 = vmatprep.subr.mxu0 0.0
    %939 = vmatpush1.msra.mxu0 0.0
    %940 = vmatprep.subr.mxu0 0.0
    %941 = vmatpush1.msra.mxu0 0.0
    %942 = vmatprep.subr.mxu0 0.0
    %943 = vmatpush1.msra.mxu0 0.0
    %944 = vmatprep.subr.mxu0 0.0
    %945 = vmatpush1.msra.mxu0 0.0
    %946 = vmatprep.subr.mxu0 0.0
    %947 = vmatpush1.msra.mxu0 0.0
    %948 = vmatprep.subr.mxu0 0.0
    %949 = vmatpush1.msra.mxu0 0.0
    %950 = vmatprep.subr.mxu0 0.0
    %951 = vmatpush1.msra.mxu0 0.0
    %952 = vmatprep.subr.mxu0 0.0
    %953 = vmatpush1.msra.mxu0 0.0
    %954 = vmatprep.subr.mxu0 0.0
    %955 = vmatpush1.msra.mxu0 0.0
    %956 = vmatprep.subr.mxu0 0.0
    %957 = vmatpush1.msra.mxu0 0.0
    %958 = vmatprep.subr.mxu0 0.0
    %959 = vmatpush1.msra.mxu0 0.0
    %960 = vmatprep.subr.mxu0 0.0
    %961 = vmatpush1.msra.mxu0 0.0
    %962 = vmatprep.subr.mxu0 0.0
    %963 = vmatpush1.msra.mxu0 0.0
    %964 = vmatprep.subr.mxu0 0.0
    %965 = vmatpush1.msra.mxu0 0.0
    %966 = vmatprep.subr.mxu0 0.0
    %967 = vmatpush1.msra.mxu0 0.0
    %968 = vmatprep.subr.mxu0 0.0
    %969 = vmatpush1.msra.mxu0 0.0
    %970 = vmatprep.subr.mxu0 0.0
    %971 = vmatpush1.msra.mxu0 0.0
    %972 = vmatprep.mubr.f32.mxu0 0.0
    %v973 = vand.u32 %v519, 4294901760
    %974 = vmatmul.mubr.f32.gmra.mrb[0].mxu0 %v973
    %v975 = vpop.f32.mrb[0].mxu0
    %v976 = vadd.f32 %v881, %v975
    %v977 = vpop.f32.mrb[0].mxu0
    %978 = vdwg.mxu0
    %979 = vmatprep.subr.mxu0 0.0
    %v980 = vand.u32 %v502, 4294901760
    %981 = vmatpush1.msra.mxu0 %v980
    %982 = vmatprep.subr.mxu0 0.0
    %v983 = vand.u32 %v503, 4294901760
    %984 = vmatpush1.msra.mxu0 %v983
    %985 = vmatprep.subr.mxu0 0.0
    %v986 = vand.u32 %v504, 4294901760
    %987 = vmatpush1.msra.mxu0 %v986
    %988 = vmatprep.subr.mxu0 0.0
    %v989 = vand.u32 %v505, 4294901760
    %990 = vmatpush1.msra.mxu0 %v989
    %991 = vmatprep.subr.mxu0 0.0
    %v992 = vand.u32 %v506, 4294901760
    %993 = vmatpush1.msra.mxu0 %v992
    %994 = vmatprep.subr.mxu0 0.0
    %v995 = vand.u32 %v507, 4294901760
    %996 = vmatpush1.msra.mxu0 %v995
    %997 = vmatprep.subr.mxu0 0.0
    %v998 = vand.u32 %v508, 4294901760
    %999 = vmatpush1.msra.mxu0 %v998
    %1000 = vmatprep.subr.mxu0 0.0
    %v1001 = vand.u32 %v509, 4294901760
    %1002 = vmatpush1.msra.mxu0 %v1001
    %1003 = vmatprep.subr.mxu0 0.0
    %1004 = vmatpush1.msra.mxu0 0.0
    %1005 = vmatprep.subr.mxu0 0.0
    %1006 = vmatpush1.msra.mxu0 0.0
    %1007 = vmatprep.subr.mxu0 0.0
    %1008 = vmatpush1.msra.mxu0 0.0
    %1009 = vmatprep.subr.mxu0 0.0
    %1010 = vmatpush1.msra.mxu0 0.0
    %1011 = vmatprep.subr.mxu0 0.0
    %1012 = vmatpush1.msra.mxu0 0.0
    %1013 = vmatprep.subr.mxu0 0.0
    %1014 = vmatpush1.msra.mxu0 0.0
    %1015 = vmatprep.subr.mxu0 0.0
    %1016 = vmatpush1.msra.mxu0 0.0
    %1017 = vmatprep.subr.mxu0 0.0
    %1018 = vmatpush1.msra.mxu0 0.0
    %1019 = vmatprep.subr.mxu0 0.0
    %1020 = vmatpush1.msra.mxu0 0.0
    %1021 = vmatprep.subr.mxu0 0.0
    %1022 = vmatpush1.msra.mxu0 0.0
    %1023 = vmatprep.subr.mxu0 0.0
    %1024 = vmatpush1.msra.mxu0 0.0
    %1025 = vmatprep.subr.mxu0 0.0
    %1026 = vmatpush1.msra.mxu0 0.0
    %1027 = vmatprep.subr.mxu0 0.0
    %1028 = vmatpush1.msra.mxu0 0.0
    %1029 = vmatprep.subr.mxu0 0.0
    %1030 = vmatpush1.msra.mxu0 0.0
    %1031 = vmatprep.subr.mxu0 0.0
    %1032 = vmatpush1.msra.mxu0 0.0
    %1033 = vmatprep.subr.mxu0 0.0
    %1034 = vmatpush1.msra.mxu0 0.0
    %1035 = vmatprep.subr.mxu0 0.0
    %1036 = vmatpush1.msra.mxu0 0.0
    %1037 = vmatprep.subr.mxu0 0.0
    %1038 = vmatpush1.msra.mxu0 0.0
    %1039 = vmatprep.subr.mxu0 0.0
    %1040 = vmatpush1.msra.mxu0 0.0
    %1041 = vmatprep.subr.mxu0 0.0
    %1042 = vmatpush1.msra.mxu0 0.0
    %1043 = vmatprep.subr.mxu0 0.0
    %1044 = vmatpush1.msra.mxu0 0.0
    %1045 = vmatprep.subr.mxu0 0.0
    %1046 = vmatpush1.msra.mxu0 0.0
    %1047 = vmatprep.subr.mxu0 0.0
    %1048 = vmatpush1.msra.mxu0 0.0
    %1049 = vmatprep.subr.mxu0 0.0
    %1050 = vmatpush1.msra.mxu0 0.0
    %1051 = vmatprep.mubr.f32.mxu0 0.0
    %v1052 = vand.u32 %v519, 4294901760
    %1053 = vmatmul.mubr.f32.gmra.mrb[0].mxu0 %v1052
    %v1054 = vpop.f32.mrb[0].mxu0
    %v1055 = vadd.f32 %v976, %v1054
    %v1056 = vpop.f32.mrb[0].mxu0
    %1057 = vdwg.mxu0
    %v1058 = vmax.f32 %v1055, 0.0
    %v1059 = vld [vmem:[%s5] sm:$0x1]
    %s1060 = sld [smem:[#allocation2]]
    %v1061 = vstv %s1060
    %vm1062 = vcmask 261120
    %v1064 = vsel %vm1062, %v1059, 0
    %v1067 = vsel %vm1062, %v1058, 0
    %1069 = vmatprep.subr.mxu0 0.0
    %v1070 = vand.u32 %v1067, 4294901760
    %1071 = vmatpush1.xpose.msra.mxu0 %v1070
    %1072 = vmatprep.subr.mxu0 0.0
    %1073 = vmatpush1.xpose.msra.mxu0 0.0
    %1074 = vmatprep.subr.mxu0 0.0
    %1075 = vmatpush1.xpose.msra.mxu0 0.0
    %1076 = vmatprep.subr.mxu0 0.0
    %1077 = vmatpush1.xpose.msra.mxu0 0.0
    %1078 = vmatprep.subr.mxu0 0.0
    %1079 = vmatpush1.xpose.msra.mxu0 0.0
    %1080 = vmatprep.subr.mxu0 0.0
    %1081 = vmatpush1.xpose.msra.mxu0 0.0
    %1082 = vmatprep.subr.mxu0 0.0
    %1083 = vmatpush1.xpose.msra.mxu0 0.0
    %1084 = vmatprep.subr.mxu0 0.0
    %1085 = vmatpush1.xpose.msra.mxu0 0.0
    %1086 = vmatprep.subr.mxu0 0.0
    %1087 = vmatpush1.xpose.msra.mxu0 0.0
    %1088 = vmatprep.subr.mxu0 0.0
    %1089 = vmatpush1.xpose.msra.mxu0 0.0
    %1090 = vmatprep.subr.mxu0 0.0
    %1091 = vmatpush1.xpose.msra.mxu0 0.0
    %1092 = vmatprep.subr.mxu0 0.0
    %1093 = vmatpush1.xpose.msra.mxu0 0.0
    %1094 = vmatprep.subr.mxu0 0.0
    %1095 = vmatpush1.xpose.msra.mxu0 0.0
    %1096 = vmatprep.subr.mxu0 0.0
    %1097 = vmatpush1.xpose.msra.mxu0 0.0
    %1098 = vmatprep.subr.mxu0 0.0
    %1099 = vmatpush1.xpose.msra.mxu0 0.0
    %1100 = vmatprep.subr.mxu0 0.0
    %1101 = vmatpush1.xpose.msra.mxu0 0.0
    %1102 = vmatprep.subr.mxu0 0.0
    %1103 = vmatpush1.xpose.msra.mxu0 0.0
    %1104 = vmatprep.subr.mxu0 0.0
    %1105 = vmatpush1.xpose.msra.mxu0 0.0
    %1106 = vmatprep.subr.mxu0 0.0
    %1107 = vmatpush1.xpose.msra.mxu0 0.0
    %1108 = vmatprep.subr.mxu0 0.0
    %1109 = vmatpush1.xpose.msra.mxu0 0.0
    %1110 = vmatprep.subr.mxu0 0.0
    %1111 = vmatpush1.xpose.msra.mxu0 0.0
    %1112 = vmatprep.subr.mxu0 0.0
    %1113 = vmatpush1.xpose.msra.mxu0 0.0
    %1114 = vmatprep.subr.mxu0 0.0
    %1115 = vmatpush1.xpose.msra.mxu0 0.0
    %1116 = vmatprep.subr.mxu0 0.0
    %1117 = vmatpush1.xpose.msra.mxu0 0.0
    %1118 = vmatprep.subr.mxu0 0.0
    %1119 = vmatpush1.xpose.msra.mxu0 0.0
    %1120 = vmatprep.subr.mxu0 0.0
    %1121 = vmatpush1.xpose.msra.mxu0 0.0
    %1122 = vmatprep.subr.mxu0 0.0
    %1123 = vmatpush1.xpose.msra.mxu0 0.0
    %1124 = vmatprep.subr.mxu0 0.0
    %1125 = vmatpush1.xpose.msra.mxu0 0.0
    %1126 = vmatprep.subr.mxu0 0.0
    %1127 = vmatpush1.xpose.msra.mxu0 0.0
    %1128 = vmatprep.subr.mxu0 0.0
    %1129 = vmatpush1.xpose.msra.mxu0 0.0
    %1130 = vmatprep.subr.mxu0 0.0
    %1131 = vmatpush1.xpose.msra.mxu0 0.0
    %1132 = vmatprep.subr.mxu0 0.0
    %1133 = vmatpush1.xpose.msra.mxu0 0.0
    %1134 = vmatprep.mubr.f32.mxu0 0.0
    %v1135 = vand.u32 %v1064, 4294901760
    %v1136 = vsub.f32 %v1064, %v1135
    %v1137 = vand.u32 %v1136, 4294901760
    %v1138 = vsub.f32 %v1136, %v1137
    %v1139 = vand.u32 %v1138, 4294901760
    %1140 = vmatmul.mubr.f32.gmra.mrb[0].mxu0 %v1139
    %v1141 = vpop.f32.mrb[0].mxu0
    %v1142 = vadd.f32 %v1061, %v1141
    %v1143 = vpop.f32.mrb[0].mxu0
    %1144 = vdwg.mxu0
    %1145 = vmatprep.subr.mxu0 0.0
    %v1146 = vand.u32 %v1067, 4294901760
    %v1147 = vsub.f32 %v1067, %v1146
    %v1148 = vand.u32 %v1147, 4294901760
    %v1149 = vsub.f32 %v1147, %v1148
    %v1150 = vand.u32 %v1149, 4294901760
    %1151 = vmatpush1.xpose.msra.mxu0 %v1150
    %1152 = vmatprep.subr.mxu0 0.0
    %1153 = vmatpush1.xpose.msra.mxu0 0.0
    %1154 = vmatprep.subr.mxu0 0.0
    %1155 = vmatpush1.xpose.msra.mxu0 0.0
    %1156 = vmatprep.subr.mxu0 0.0
    %1157 = vmatpush1.xpose.msra.mxu0 0.0
    %1158 = vmatprep.subr.mxu0 0.0
    %1159 = vmatpush1.xpose.msra.mxu0 0.0
    %1160 = vmatprep.subr.mxu0 0.0
    %1161 = vmatpush1.xpose.msra.mxu0 0.0
    %1162 = vmatprep.subr.mxu0 0.0
    %1163 = vmatpush1.xpose.msra.mxu0 0.0
    %1164 = vmatprep.subr.mxu0 0.0
    %1165 = vmatpush1.xpose.msra.mxu0 0.0
    %1166 = vmatprep.subr.mxu0 0.0
    %1167 = vmatpush1.xpose.msra.mxu0 0.0
    %1168 = vmatprep.subr.mxu0 0.0
    %1169 = vmatpush1.xpose.msra.mxu0 0.0
    %1170 = vmatprep.subr.mxu0 0.0
    %1171 = vmatpush1.xpose.msra.mxu0 0.0
    %1172 = vmatprep.subr.mxu0 0.0
    %1173 = vmatpush1.xpose.msra.mxu0 0.0
    %1174 = vmatprep.subr.mxu0 0.0
    %1175 = vmatpush1.xpose.msra.mxu0 0.0
    %1176 = vmatprep.subr.mxu0 0.0
    %1177 = vmatpush1.xpose.msra.mxu0 0.0
    %1178 = vmatprep.subr.mxu0 0.0
    %1179 = vmatpush1.xpose.msra.mxu0 0.0
    %1180 = vmatprep.subr.mxu0 0.0
    %1181 = vmatpush1.xpose.msra.mxu0 0.0
    %1182 = vmatprep.subr.mxu0 0.0
    %1183 = vmatpush1.xpose.msra.mxu0 0.0
    %1184 = vmatprep.subr.mxu0 0.0
    %1185 = vmatpush1.xpose.msra.mxu0 0.0
    %1186 = vmatprep.subr.mxu0 0.0
    %1187 = vmatpush1.xpose.msra.mxu0 0.0
    %1188 = vmatprep.subr.mxu0 0.0
    %1189 = vmatpush1.xpose.msra.mxu0 0.0
    %1190 = vmatprep.subr.mxu0 0.0
    %1191 = vmatpush1.xpose.msra.mxu0 0.0
    %1192 = vmatprep.subr.mxu0 0.0
    %1193 = vmatpush1.xpose.msra.mxu0 0.0
    %1194 = vmatprep.subr.mxu0 0.0
    %1195 = vmatpush1.xpose.msra.mxu0 0.0
    %1196 = vmatprep.subr.mxu0 0.0
    %1197 = vmatpush1.xpose.msra.mxu0 0.0
    %1198 = vmatprep.subr.mxu0 0.0
    %1199 = vmatpush1.xpose.msra.mxu0 0.0
    %1200 = vmatprep.subr.mxu0 0.0
    %1201 = vmatpush1.xpose.msra.mxu0 0.0
    %1202 = vmatprep.subr.mxu0 0.0
    %1203 = vmatpush1.xpose.msra.mxu0 0.0
    %1204 = vmatprep.subr.mxu0 0.0
    %1205 = vmatpush1.xpose.msra.mxu0 0.0
    %1206 = vmatprep.subr.mxu0 0.0
    %1207 = vmatpush1.xpose.msra.mxu0 0.0
    %1208 = vmatprep.subr.mxu0 0.0
    %1209 = vmatpush1.xpose.msra.mxu0 0.0
    %1210 = vmatprep.subr.mxu0 0.0
    %1211 = vmatpush1.xpose.msra.mxu0 0.0
    %1212 = vmatprep.subr.mxu0 0.0
    %1213 = vmatpush1.xpose.msra.mxu0 0.0
    %1214 = vmatprep.mubr.f32.mxu0 0.0
    %v1215 = vand.u32 %v1064, 4294901760
    %1216 = vmatmul.mubr.f32.gmra.mrb[0].mxu0 %v1215
    %v1217 = vpop.f32.mrb[0].mxu0
    %v1218 = vadd.f32 %v1142, %v1217
    %v1219 = vpop.f32.mrb[0].mxu0
    %1220 = vdwg.mxu0
    %1221 = vmatprep.subr.mxu0 0.0
    %v1222 = vand.u32 %v1067, 4294901760
    %v1223 = vsub.f32 %v1067, %v1222
    %1224 = vmatpush1.xpose.msra.mxu0 %v1223
    %1225 = vmatprep.subr.mxu0 0.0
    %1226 = vmatpush1.xpose.msra.mxu0 0.0
    %1227 = vmatprep.subr.mxu0 0.0
    %1228 = vmatpush1.xpose.msra.mxu0 0.0
    %1229 = vmatprep.subr.mxu0 0.0
    %1230 = vmatpush1.xpose.msra.mxu0 0.0
    %1231 = vmatprep.subr.mxu0 0.0
    %1232 = vmatpush1.xpose.msra.mxu0 0.0
    %1233 = vmatprep.subr.mxu0 0.0
    %1234 = vmatpush1.xpose.msra.mxu0 0.0
    %1235 = vmatprep.subr.mxu0 0.0
    %1236 = vmatpush1.xpose.msra.mxu0 0.0
    %1237 = vmatprep.subr.mxu0 0.0
    %1238 = vmatpush1.xpose.msra.mxu0 0.0
    %1239 = vmatprep.subr.mxu0 0.0
    %1240 = vmatpush1.xpose.msra.mxu0 0.0
    %1241 = vmatprep.subr.mxu0 0.0
    %1242 = vmatpush1.xpose.msra.mxu0 0.0
    %1243 = vmatprep.subr.mxu0 0.0
    %1244 = vmatpush1.xpose.msra.mxu0 0.0
    %1245 = vmatprep.subr.mxu0 0.0
    %1246 = vmatpush1.xpose.msra.mxu0 0.0
    %1247 = vmatprep.subr.mxu0 0.0
    %1248 = vmatpush1.xpose.msra.mxu0 0.0
    %1249 = vmatprep.subr.mxu0 0.0
    %1250 = vmatpush1.xpose.msra.mxu0 0.0
    %1251 = vmatprep.subr.mxu0 0.0
    %1252 = vmatpush1.xpose.msra.mxu0 0.0
    %1253 = vmatprep.subr.mxu0 0.0
    %1254 = vmatpush1.xpose.msra.mxu0 0.0
    %1255 = vmatprep.subr.mxu0 0.0
    %1256 = vmatpush1.xpose.msra.mxu0 0.0
    %1257 = vmatprep.subr.mxu0 0.0
    %1258 = vmatpush1.xpose.msra.mxu0 0.0
    %1259 = vmatprep.subr.mxu0 0.0
    %1260 = vmatpush1.xpose.msra.mxu0 0.0
    %1261 = vmatprep.subr.mxu0 0.0
    %1262 = vmatpush1.xpose.msra.mxu0 0.0
    %1263 = vmatprep.subr.mxu0 0.0
    %1264 = vmatpush1.xpose.msra.mxu0 0.0
    %1265 = vmatprep.subr.mxu0 0.0
    %1266 = vmatpush1.xpose.msra.mxu0 0.0
    %1267 = vmatprep.subr.mxu0 0.0
    %1268 = vmatpush1.xpose.msra.mxu0 0.0
    %1269 = vmatprep.subr.mxu0 0.0
    %1270 = vmatpush1.xpose.msra.mxu0 0.0
    %1271 = vmatprep.subr.mxu0 0.0
    %1272 = vmatpush1.xpose.msra.mxu0 0.0
    %1273 = vmatprep.subr.mxu0 0.0
    %1274 = vmatpush1.xpose.msra.mxu0 0.0
    %1275 = vmatprep.subr.mxu0 0.0
    %1276 = vmatpush1.xpose.msra.mxu0 0.0
    %1277 = vmatprep.subr.mxu0 0.0
    %1278 = vmatpush1.xpose.msra.mxu0 0.0
    %1279 = vmatprep.subr.mxu0 0.0
    %1280 = vmatpush1.xpose.msra.mxu0 0.0
    %1281 = vmatprep.subr.mxu0 0.0
    %1282 = vmatpush1.xpose.msra.mxu0 0.0
    %1283 = vmatprep.subr.mxu0 0.0
    %1284 = vmatpush1.xpose.msra.mxu0 0.0
    %1285 = vmatprep.subr.mxu0 0.0
    %1286 = vmatpush1.xpose.msra.mxu0 0.0
    %1287 = vmatprep.mubr.f32.mxu0 0.0
    %v1288 = vand.u32 %v1064, 4294901760
    %v1289 = vsub.f32 %v1064, %v1288
    %1290 = vmatmul.mubr.f32.gmra.mrb[0].mxu0 %v1289
    %v1291 = vpop.f32.mrb[0].mxu0
    %v1292 = vadd.f32 %v1218, %v1291
    %v1293 = vpop.f32.mrb[0].mxu0
    %1294 = vdwg.mxu0
    %1295 = vmatprep.subr.mxu0 0.0
    %v1296 = vand.u32 %v1067, 4294901760
    %1297 = vmatpush1.xpose.msra.mxu0 %v1296
    %1298 = vmatprep.subr.mxu0 0.0
    %1299 = vmatpush1.xpose.msra.mxu0 0.0
    %1300 = vmatprep.subr.mxu0 0.0
    %1301 = vmatpush1.xpose.msra.mxu0 0.0
    %1302 = vmatprep.subr.mxu0 0.0
    %1303 = vmatpush1.xpose.msra.mxu0 0.0
    %1304 = vmatprep.subr.mxu0 0.0
    %1305 = vmatpush1.xpose.msra.mxu0 0.0
    %1306 = vmatprep.subr.mxu0 0.0
    %1307 = vmatpush1.xpose.msra.mxu0 0.0
    %1308 = vmatprep.subr.mxu0 0.0
    %1309 = vmatpush1.xpose.msra.mxu0 0.0
    %1310 = vmatprep.subr.mxu0 0.0
    %1311 = vmatpush1.xpose.msra.mxu0 0.0
    %1312 = vmatprep.subr.mxu0 0.0
    %1313 = vmatpush1.xpose.msra.mxu0 0.0
    %1314 = vmatprep.subr.mxu0 0.0
    %1315 = vmatpush1.xpose.msra.mxu0 0.0
    %1316 = vmatprep.subr.mxu0 0.0
    %1317 = vmatpush1.xpose.msra.mxu0 0.0
    %1318 = vmatprep.subr.mxu0 0.0
    %1319 = vmatpush1.xpose.msra.mxu0 0.0
    %1320 = vmatprep.subr.mxu0 0.0
    %1321 = vmatpush1.xpose.msra.mxu0 0.0
    %1322 = vmatprep.subr.mxu0 0.0
    %1323 = vmatpush1.xpose.msra.mxu0 0.0
    %1324 = vmatprep.subr.mxu0 0.0
    %1325 = vmatpush1.xpose.msra.mxu0 0.0
    %1326 = vmatprep.subr.mxu0 0.0
    %1327 = vmatpush1.xpose.msra.mxu0 0.0
    %1328 = vmatprep.subr.mxu0 0.0
    %1329 = vmatpush1.xpose.msra.mxu0 0.0
    %1330 = vmatprep.subr.mxu0 0.0
    %1331 = vmatpush1.xpose.msra.mxu0 0.0
    %1332 = vmatprep.subr.mxu0 0.0
    %1333 = vmatpush1.xpose.msra.mxu0 0.0
    %1334 = vmatprep.subr.mxu0 0.0
    %1335 = vmatpush1.xpose.msra.mxu0 0.0
    %1336 = vmatprep.subr.mxu0 0.0
    %1337 = vmatpush1.xpose.msra.mxu0 0.0
    %1338 = vmatprep.subr.mxu0 0.0
    %1339 = vmatpush1.xpose.msra.mxu0 0.0
    %1340 = vmatprep.subr.mxu0 0.0
    %1341 = vmatpush1.xpose.msra.mxu0 0.0
    %1342 = vmatprep.subr.mxu0 0.0
    %1343 = vmatpush1.xpose.msra.mxu0 0.0
    %1344 = vmatprep.subr.mxu0 0.0
    %1345 = vmatpush1.xpose.msra.mxu0 0.0
    %1346 = vmatprep.subr.mxu0 0.0
    %1347 = vmatpush1.xpose.msra.mxu0 0.0
    %1348 = vmatprep.subr.mxu0 0.0
    %1349 = vmatpush1.xpose.msra.mxu0 0.0
    %1350 = vmatprep.subr.mxu0 0.0
    %1351 = vmatpush1.xpose.msra.mxu0 0.0
    %1352 = vmatprep.subr.mxu0 0.0
    %1353 = vmatpush1.xpose.msra.mxu0 0.0
    %1354 = vmatprep.subr.mxu0 0.0
    %1355 = vmatpush1.xpose.msra.mxu0 0.0
    %1356 = vmatprep.subr.mxu0 0.0
    %1357 = vmatpush1.xpose.msra.mxu0 0.0
    %1358 = vmatprep.subr.mxu0 0.0
    %1359 = vmatpush1.xpose.msra.mxu0 0.0
    %1360 = vmatprep.mubr.f32.mxu0 0.0
    %v1361 = vand.u32 %v1064, 4294901760
    %v1362 = vsub.f32 %v1064, %v1361
    %v1363 = vand.u32 %v1362, 4294901760
    %1364 = vmatmul.mubr.f32.gmra.mrb[0].mxu0 %v1363
    %v1365 = vpop.f32.mrb[0].mxu0
    %v1366 = vadd.f32 %v1292, %v1365
    %v1367 = vpop.f32.mrb[0].mxu0
    %1368 = vdwg.mxu0
    %1369 = vmatprep.subr.mxu0 0.0
    %v1370 = vand.u32 %v1067, 4294901760
    %v1371 = vsub.f32 %v1067, %v1370
    %v1372 = vand.u32 %v1371, 4294901760
    %1373 = vmatpush1.xpose.msra.mxu0 %v1372
    %1374 = vmatprep.subr.mxu0 0.0
    %1375 = vmatpush1.xpose.msra.mxu0 0.0
    %1376 = vmatprep.subr.mxu0 0.0
    %1377 = vmatpush1.xpose.msra.mxu0 0.0
    %1378 = vmatprep.subr.mxu0 0.0
    %1379 = vmatpush1.xpose.msra.mxu0 0.0
    %1380 = vmatprep.subr.mxu0 0.0
    %1381 = vmatpush1.xpose.msra.mxu0 0.0
    %1382 = vmatprep.subr.mxu0 0.0
    %1383 = vmatpush1.xpose.msra.mxu0 0.0
    %1384 = vmatprep.subr.mxu0 0.0
    %1385 = vmatpush1.xpose.msra.mxu0 0.0
    %1386 = vmatprep.subr.mxu0 0.0
    %1387 = vmatpush1.xpose.msra.mxu0 0.0
    %1388 = vmatprep.subr.mxu0 0.0
    %1389 = vmatpush1.xpose.msra.mxu0 0.0
    %1390 = vmatprep.subr.mxu0 0.0
    %1391 = vmatpush1.xpose.msra.mxu0 0.0
    %1392 = vmatprep.subr.mxu0 0.0
    %1393 = vmatpush1.xpose.msra.mxu0 0.0
    %1394 = vmatprep.subr.mxu0 0.0
    %1395 = vmatpush1.xpose.msra.mxu0 0.0
    %1396 = vmatprep.subr.mxu0 0.0
    %1397 = vmatpush1.xpose.msra.mxu0 0.0
    %1398 = vmatprep.subr.mxu0 0.0
    %1399 = vmatpush1.xpose.msra.mxu0 0.0
    %1400 = vmatprep.subr.mxu0 0.0
    %1401 = vmatpush1.xpose.msra.mxu0 0.0
    %1402 = vmatprep.subr.mxu0 0.0
    %1403 = vmatpush1.xpose.msra.mxu0 0.0
    %1404 = vmatprep.subr.mxu0 0.0
    %1405 = vmatpush1.xpose.msra.mxu0 0.0
    %1406 = vmatprep.subr.mxu0 0.0
    %1407 = vmatpush1.xpose.msra.mxu0 0.0
    %1408 = vmatprep.subr.mxu0 0.0
    %1409 = vmatpush1.xpose.msra.mxu0 0.0
    %1410 = vmatprep.subr.mxu0 0.0
    %1411 = vmatpush1.xpose.msra.mxu0 0.0
    %1412 = vmatprep.subr.mxu0 0.0
    %1413 = vmatpush1.xpose.msra.mxu0 0.0
    %1414 = vmatprep.subr.mxu0 0.0
    %1415 = vmatpush1.xpose.msra.mxu0 0.0
    %1416 = vmatprep.subr.mxu0 0.0
    %1417 = vmatpush1.xpose.msra.mxu0 0.0
    %1418 = vmatprep.subr.mxu0 0.0
    %1419 = vmatpush1.xpose.msra.mxu0 0.0
    %1420 = vmatprep.subr.mxu0 0.0
    %1421 = vmatpush1.xpose.msra.mxu0 0.0
    %1422 = vmatprep.subr.mxu0 0.0
    %1423 = vmatpush1.xpose.msra.mxu0 0.0
    %1424 = vmatprep.subr.mxu0 0.0
    %1425 = vmatpush1.xpose.msra.mxu0 0.0
    %1426 = vmatprep.subr.mxu0 0.0
    %1427 = vmatpush1.xpose.msra.mxu0 0.0
    %1428 = vmatprep.subr.mxu0 0.0
    %1429 = vmatpush1.xpose.msra.mxu0 0.0
    %1430 = vmatprep.subr.mxu0 0.0
    %1431 = vmatpush1.xpose.msra.mxu0 0.0
    %1432 = vmatprep.subr.mxu0 0.0
    %1433 = vmatpush1.xpose.msra.mxu0 0.0
    %1434 = vmatprep.subr.mxu0 0.0
    %1435 = vmatpush1.xpose.msra.mxu0 0.0
    %1436 = vmatprep.mubr.f32.mxu0 0.0
    %v1437 = vand.u32 %v1064, 4294901760
    %1438 = vmatmul.mubr.f32.gmra.mrb[0].mxu0 %v1437
    %v1439 = vpop.f32.mrb[0].mxu0
    %v1440 = vadd.f32 %v1366, %v1439
    %v1441 = vpop.f32.mrb[0].mxu0
    %1442 = vdwg.mxu0
    %1443 = vmatprep.subr.mxu0 0.0
    %v1444 = vand.u32 %v1067, 4294901760
    %1445 = vmatpush1.xpose.msra.mxu0 %v1444
    %1446 = vmatprep.subr.mxu0 0.0
    %1447 = vmatpush1.xpose.msra.mxu0 0.0
    %1448 = vmatprep.subr.mxu0 0.0
    %1449 = vmatpush1.xpose.msra.mxu0 0.0
    %1450 = vmatprep.subr.mxu0 0.0
    %1451 = vmatpush1.xpose.msra.mxu0 0.0
    %1452 = vmatprep.subr.mxu0 0.0
    %1453 = vmatpush1.xpose.msra.mxu0 0.0
    %1454 = vmatprep.subr.mxu0 0.0
    %1455 = vmatpush1.xpose.msra.mxu0 0.0
    %1456 = vmatprep.subr.mxu0 0.0
    %1457 = vmatpush1.xpose.msra.mxu0 0.0
    %1458 = vmatprep.subr.mxu0 0.0
    %1459 = vmatpush1.xpose.msra.mxu0 0.0
    %1460 = vmatprep.subr.mxu0 0.0
    %1461 = vmatpush1.xpose.msra.mxu0 0.0
    %1462 = vmatprep.subr.mxu0 0.0
    %1463 = vmatpush1.xpose.msra.mxu0 0.0
    %1464 = vmatprep.subr.mxu0 0.0
    %1465 = vmatpush1.xpose.msra.mxu0 0.0
    %1466 = vmatprep.subr.mxu0 0.0
    %1467 = vmatpush1.xpose.msra.mxu0 0.0
    %1468 = vmatprep.subr.mxu0 0.0
    %1469 = vmatpush1.xpose.msra.mxu0 0.0
    %1470 = vmatprep.subr.mxu0 0.0
    %1471 = vmatpush1.xpose.msra.mxu0 0.0
    %1472 = vmatprep.subr.mxu0 0.0
    %1473 = vmatpush1.xpose.msra.mxu0 0.0
    %1474 = vmatprep.subr.mxu0 0.0
    %1475 = vmatpush1.xpose.msra.mxu0 0.0
    %1476 = vmatprep.subr.mxu0 0.0
    %1477 = vmatpush1.xpose.msra.mxu0 0.0
    %1478 = vmatprep.subr.mxu0 0.0
    %1479 = vmatpush1.xpose.msra.mxu0 0.0
    %1480 = vmatprep.subr.mxu0 0.0
    %1481 = vmatpush1.xpose.msra.mxu0 0.0
    %1482 = vmatprep.subr.mxu0 0.0
    %1483 = vmatpush1.xpose.msra.mxu0 0.0
    %1484 = vmatprep.subr.mxu0 0.0
    %1485 = vmatpush1.xpose.msra.mxu0 0.0
    %1486 = vmatprep.subr.mxu0 0.0
    %1487 = vmatpush1.xpose.msra.mxu0 0.0
    %1488 = vmatprep.subr.mxu0 0.0
    %1489 = vmatpush1.xpose.msra.mxu0 0.0
    %1490 = vmatprep.subr.mxu0 0.0
    %1491 = vmatpush1.xpose.msra.mxu0 0.0
    %1492 = vmatprep.subr.mxu0 0.0
    %1493 = vmatpush1.xpose.msra.mxu0 0.0
    %1494 = vmatprep.subr.mxu0 0.0
    %1495 = vmatpush1.xpose.msra.mxu0 0.0
    %1496 = vmatprep.subr.mxu0 0.0
    %1497 = vmatpush1.xpose.msra.mxu0 0.0
    %1498 = vmatprep.subr.mxu0 0.0
    %1499 = vmatpush1.xpose.msra.mxu0 0.0
    %1500 = vmatprep.subr.mxu0 0.0
    %1501 = vmatpush1.xpose.msra.mxu0 0.0
    %1502 = vmatprep.subr.mxu0 0.0
    %1503 = vmatpush1.xpose.msra.mxu0 0.0
    %1504 = vmatprep.subr.mxu0 0.0
    %1505 = vmatpush1.xpose.msra.mxu0 0.0
    %1506 = vmatprep.subr.mxu0 0.0
    %1507 = vmatpush1.xpose.msra.mxu0 0.0
    %1508 = vmatprep.mubr.f32.mxu0 0.0
    %v1509 = vand.u32 %v1064, 4294901760
    %1510 = vmatmul.mubr.f32.gmra.mrb[0].mxu0 %v1509
    %v1511 = vpop.f32.mrb[0].mxu0
    %v1512 = vadd.f32 %v1440, %v1511
    %v1513 = vpop.f32.mrb[0].mxu0
    %1514 = vdwg.mxu0
    %vm1515 = vcmask 57344
    %1516 = vst.msk [vmem:[#allocation3] sm:$0x1] %vm1515, %v1512
    // Predicated region
    $region30: #{tpu_custom_call.1} parent=1 // pred_check
      _
    $region31: #{tpu_custom_call.1} parent=1 // pred_check_branch
      %1518 = sbr.rel (0) target = $region33
    $region32: #{tpu_custom_call.1} parent=1 // pred_region
      %s1520 = ssub.s32 16, 16
      %1521 = vsyncadd [#allocation4], %s1520
      %s1523 = sshll.u32 [#allocation3], 4
      %s1524 = int_to_ptr.vmem [resolvable:$true] %s1523
      %1526 = dma.vmem_to_hbm [thread:$0]  %s1524, 16, %s7, [#allocation4]
    $region33: #{tpu_custom_call.1} parent=1 // pred_fallthru
      _
    // Predicated region
    $region34: #{tpu_custom_call.1} parent=1 // pred_check
      _
    $region35: #{tpu_custom_call.1} parent=1 // pred_check_branch
      %1528 = sbr.rel (0) target = $region37
    $region36: #{tpu_custom_call.1} parent=1 // pred_region
      %1529 = dma.done [#allocation4], 16
    $region37: #{tpu_custom_call.1} parent=1 // pred_fallthru
      _
    %1530 = vsyncpa [#allocation4], 1

</llo_original>
